<compile_context>
chip_gen: v7x
topology: tpu7x:2x2x1
jax: 0.10.0
libtpu: 0.0.40
codegen_flags: <defaults>
</compile_context>

<pallas_src>
import functools

import jax
import jax.numpy as jnp
import numpy as np
from jax import lax
from jax.experimental import pallas as pl
from jax.experimental.pallas import tpu as pltpu

EPS = 1e-5


# ------------------------------ Pallas kernel ------------------------------

def _fire_deconv_kernel(x_halo_ref, x_mid_ref,
                        w_sq_ref, b_sq_ref,
                        w_dec_ref, b_dec_ref,
                        w_ex_ref, b_ex_ref,
                        o_ref, *, num_row_blocks):
    # x_mid: (1, R*W, Cin) rows of this block; x_halo: (1, 2*W, Cin) = the row
    # above and the row below (zero rows at the image edges).  Output block:
    # (1, 2*R*W, Cex) rows ordered (parity, row, col): first R*W rows are the
    # even output columns (2j), last R*W the odd ones (2j+1).
    _, rw, _ = x_mid_ref.shape
    w = x_halo_ref.shape[1] // 2
    r = rw // w
    rp2 = r + 2
    c = w_sq_ref.shape[1]
    cex = b_ex_ref.shape[1]
    cd = w_sq_ref.dtype                      # MXU compute dtype (f32 or bf16)

    # ---- squeeze 1x1 + BN + ReLU: concat AFTER the matmul (Cin >> C_sq) ----
    b_sq = b_sq_ref[...]
    sq_mid = jnp.maximum(
        jnp.dot(x_mid_ref[0], w_sq_ref[...],
                preferred_element_type=jnp.float32) + b_sq, 0.0)
    sq_halo = jnp.maximum(
        jnp.dot(x_halo_ref[0], w_sq_ref[...],
                preferred_element_type=jnp.float32) + b_sq, 0.0)
    sq = jnp.concatenate([sq_halo[:w], sq_mid, sq_halo[w:]], axis=0)  # (rp2*w, c)

    # ---- deconv (1x4, stride (1,2), pad (0,1)) + BN + ReLU -----------------
    # one (rp2*w, C) x (C, 4C) matmul on the unshifted squeeze output; the
    # column taps are recombined afterwards on narrow C-wide slices:
    #   t[j] = [x[j]@wk3 | x[j]@wk1 | x[j]@wk2 | x[j]@wk0]
    #   even col 2j   = t[j-1][0:C]   + t[j][C:2C]
    #   odd  col 2j+1 = t[j][2C:3C]   + t[j+1][3C:4C]
    t = jnp.dot(sq.astype(cd), w_dec_ref[...],
                preferred_element_type=jnp.float32)
    t3 = t.reshape(rp2, w, 4 * c)
    zcol = jnp.zeros((rp2, 1, c), jnp.float32)
    t_prev = jnp.concatenate([zcol, t3[:, :w - 1, 0:c]], axis=1)       # from col j-1
    t_next = jnp.concatenate([t3[:, 1:, 3 * c:4 * c], zcol], axis=1)   # from col j+1
    b_dec = b_dec_ref[...]
    dec_e = jnp.maximum(t_prev + t3[:, :, c:2 * c] + b_dec, 0.0)       # even cols
    dec_o = jnp.maximum(t3[:, :, 2 * c:3 * c] + t_next + b_dec, 0.0)   # odd cols

    # ---- zero dec halo rows at image top/bottom (3x3 zero padding in H) ----
    blk = pl.program_id(0) % num_row_blocks
    lo = jnp.where(blk == 0, 1, 0)
    hi = jnp.where(blk == num_row_blocks - 1, rp2 - 1, rp2)
    row = lax.broadcasted_iota(jnp.int32, (rp2, 1, 1), 0)
    keep = jnp.logical_and(row >= lo, row < hi).astype(jnp.float32)
    dec_e = dec_e * keep
    dec_o = dec_o * keep

    # ---- expand ex1x1 + ex3x3 (pad 1) + BN + ReLU --------------------------
    # No 9C im2col: build the 3 kw taps once per parity, then accumulate over
    # the 3 kh row shifts with even/odd stacked along M (one matmul per kh).
    odd_m1 = jnp.concatenate([zcol, dec_o[:, :w - 1, :]], axis=1)      # col 2j-1
    even_p1 = jnp.concatenate([dec_e[:, 1:, :], zcol], axis=1)         # col 2j+2
    a_e = jnp.concatenate([odd_m1, dec_e, dec_o], axis=-1).astype(cd)  # kw=0,1,2
    a_o = jnp.concatenate([dec_e, dec_o, even_p1], axis=-1).astype(cd)
    a = jnp.stack([a_e, a_o], axis=0)                                  # (2, rp2, w, 3C)

    acc = jnp.zeros((2 * r * w, cex), jnp.float32)
    for kh in range(3):                                                # unrolled
        x_kh = a[:, kh:kh + r].reshape(2 * r * w, 3 * c)
        acc = acc + jnp.dot(x_kh, w_ex_ref[kh],
                            preferred_element_type=jnp.float32)
    y = jnp.maximum(acc + b_ex_ref[...], 0.0)

    # single lane-offset-0 full-block store
    o_ref[...] = y.reshape(1, 2 * r * w, cex)


# ----------------------------- kernel wrapper ------------------------------

def _estimate_vmem_bytes(r, w, cin, c, cex, act_bytes):
    """Rough per-grid-step VMEM footprint (pipelined blocks + live values)."""
    rp2 = r + 2
    f32 = 4
    io = (2 * act_bytes * (r * w + 2 * w) * cin          # double-buffered inputs
          + 2 * f32 * 2 * r * w * cex)                   # double-buffered output
    inter = (f32 * rp2 * w * (c + 4 * c + 2 * c)         # sq, t, dec_e/dec_o
             + act_bytes * rp2 * w * 3 * c * 4           # a_e, a_o, stacked a
             + act_bytes * 2 * r * w * 3 * c             # per-kh matmul operand
             + f32 * 2 * (2 * r * w * cex))              # acc + y
    weights = (2 * act_bytes * (cin * c + c * 4 * c + 9 * c * cex)
               + 2 * f32 * (2 * c + cex))
    return io + inter + weights


def _pick_row_block(h, w, cin, c, cex, act_bytes, requested=None,
                    budget_bytes=24 << 20):
    # budget default keeps the per-step live set well inside v7x's 64 MiB/TC
    # and the 32 MiB scoped default on v5e/v6e.  Keep >=2 blocks per image
    # where possible so v7x can shard the grid across its 2 TensorCores.
    if requested is not None:
        if h % requested != 0:
            raise ValueError(f"rows_per_block={requested} must divide H={h}")
        return requested
    for r in range(h, 0, -1):
        if h % r == 0 and _estimate_vmem_bytes(r, w, cin, c, cex,
                                               act_bytes) <= budget_bytes:
            return r
    return 1


def fire_deconv_forward(x_nchw, params, rows_per_block=None, out_layout="nchw"):
    n, cin, h, w = x_nchw.shape
    c = params['sq_w'].shape[1]
    cex = params['ex_b'].shape[1]
    cd = params['sq_w'].dtype                       # compute dtype from weights
    act_bytes = jnp.dtype(cd).itemsize
    r = _pick_row_block(h, w, cin, c, cex, act_bytes, rows_per_block)
    hb = h // r

    x = jnp.transpose(x_nchw, (0, 2, 3, 1)).astype(cd)     # NCHW -> NHWC
    x_rows = x.reshape(n, hb, r, w, cin)
    zrow = jnp.zeros((n, 1, 1, w, cin), cd)
    # row above / below each block (zero rows at the image top/bottom)
    x_top = jnp.concatenate([zrow, x_rows[:, :-1, r - 1:r]], axis=1)
    x_bot = jnp.concatenate([x_rows[:, 1:, 0:1], zrow], axis=1)
    x_halo = jnp.concatenate([x_top, x_bot], axis=2).reshape(n * hb, 2 * w, cin)
    x_mid = x_rows.reshape(n * hb, r * w, cin)

    est = _estimate_vmem_bytes(r, w, cin, c, cex, act_bytes)
    vmem_limit = int(min(64 << 20, max(32 << 20, 2 * est)))

    kernel = functools.partial(_fire_deconv_kernel, num_row_blocks=hb)
    out = pl.pallas_call(
        kernel,
        out_shape=jax.ShapeDtypeStruct((n * hb, 2 * r * w, cex), jnp.float32),
        grid=(n * hb,),
        in_specs=[
            pl.BlockSpec((1, 2 * w, cin), lambda i: (i, 0, 0)),     # halo rows
            pl.BlockSpec((1, r * w, cin), lambda i: (i, 0, 0)),     # block rows
            # TODO(synk): pipeline_mode=pl.Buffered(1) on these constant
            # operands would free one extra weight copy of VMEM on v7x.
            pl.BlockSpec((cin, c), lambda i: (0, 0)),               # w_sq
            pl.BlockSpec((1, c), lambda i: (0, 0)),                 # b_sq
            pl.BlockSpec((c, 4 * c), lambda i: (0, 0)),             # w_dec packed
            pl.BlockSpec((1, c), lambda i: (0, 0)),                 # b_dec
            pl.BlockSpec((3, 3 * c, cex), lambda i: (0, 0, 0)),     # w_ex (per kh)
            pl.BlockSpec((1, cex), lambda i: (0, 0)),               # b_ex
        ],
        out_specs=pl.BlockSpec((1, 2 * r * w, cex), lambda i: (i, 0, 0)),
        compiler_params=pltpu.CompilerParams(
            dimension_semantics=("parallel",),
            vmem_limit_bytes=vmem_limit),
    )(x_halo, x_mid,
      params['sq_w'], params['sq_b'],
      params['dec_w'], params['dec_b'],
      params['ex_w'], params['ex_b'])

    out = out.reshape(n, hb, 2, r, w, cex)
    if out_layout == "nhwc":
        # channels-last consumers skip the NCHW boundary transpose entirely.
        return jnp.transpose(out, (0, 1, 3, 4, 2, 5)).reshape(n, h, 2 * w, cex)
    out = jnp.transpose(out, (0, 5, 1, 3, 4, 2)).reshape(n, cex, h, 2 * w)
    return out


# ------------------------ parameters & BN folding --------------------------

def bn_scale_shift(bn):
    scale = bn['gamma'] / jnp.sqrt(bn['var'] + EPS)
    shift = bn['beta'] - bn['mean'] * scale
    return scale, shift


def bn_params(key, c):
    k1, k2, k3, k4 = jax.random.split(key, 4)
    return dict(gamma=1.0 + 0.1 * jax.random.normal(k1, (c,), jnp.float32),
                beta=0.1 * jax.random.normal(k2, (c,), jnp.float32),
                mean=0.1 * jax.random.normal(k3, (c,), jnp.float32),
                var=0.5 + jax.random.uniform(k4, (c,), jnp.float32))


def make_raw_params(key, cin, c_sq, c_e1, c_e3):
    ks = jax.random.split(key, 12)

    def rn(k, shape):
        return 0.1 * jax.random.normal(k, shape, jnp.float32)

    return {
        'sq_w': rn(ks[0], (c_sq, cin, 1, 1)),          # Conv2d (O, I, kh, kw)
        'sq_b': rn(ks[1], (c_sq,)),
        'sq_bn': bn_params(ks[2], c_sq),
        'dec_w': rn(ks[3], (c_sq, c_sq, 1, 4)),        # ConvTranspose2d (I, O, kh, kw)
        'dec_b': rn(ks[4], (c_sq,)),
        'dec_bn': bn_params(ks[5], c_sq),
        'ex1_w': rn(ks[6], (c_e1, c_sq, 1, 1)),
        'ex1_b': rn(ks[7], (c_e1,)),
        'ex1_bn': bn_params(ks[8], c_e1),
        'ex3_w': rn(ks[9], (c_e3, c_sq, 3, 3)),
        'ex3_b': rn(ks[10], (c_e3,)),
        'ex3_bn': bn_params(ks[11], c_e3),
    }


def fold_params(raw):
    c = raw['dec_w'].shape[0]                           # c_sq
    p = {}

    # squeeze 1x1: (Cin, C) + folded BN
    s, t = bn_scale_shift(raw['sq_bn'])
    p['sq_w'] = jnp.transpose(raw['sq_w'][:, :, 0, 0], (1, 0)) * s[None, :]
    p['sq_b'] = (raw['sq_b'] * s + t)[None, :]

    # deconv: 4 taps packed along the OUTPUT axis -> one (C, 4C) matrix.
    #   t[j] = [x[j]@wk3 | x[j]@wk1 | x[j]@wk2 | x[j]@wk0]
    #   even col 2j = t[j-1][0:C] + t[j][C:2C];  odd col 2j+1 = t[j][2C:3C] + t[j+1][3C:4C]
    s, t = bn_scale_shift(raw['dec_bn'])
    wk = jnp.transpose(raw['dec_w'][:, :, 0, :], (2, 0, 1)) * s[None, None, :]
    p['dec_w'] = jnp.concatenate([wk[3], wk[1], wk[2], wk[0]], axis=1)  # (C, 4C)
    p['dec_b'] = (raw['dec_b'] * s + t)[None, :]

    # expand: per-kh (3C, C1+C3) blocks with ex1x1 folded at the centre tap.
    s1, t1 = bn_scale_shift(raw['ex1_bn'])
    w1 = jnp.transpose(raw['ex1_w'][:, :, 0, 0], (1, 0)) * s1[None, :]
    b1 = (raw['ex1_b'] * s1 + t1)[None, :]
    s3, t3 = bn_scale_shift(raw['ex3_bn'])
    w3 = jnp.transpose(raw['ex3_w'], (2, 3, 1, 0)) * s3[None, None, None, :]
    b3 = (raw['ex3_b'] * s3 + t3)[None, :]
    c1 = w1.shape[1]
    zero_c1 = jnp.zeros((c, c1), jnp.float32)
    kh_blocks = []
    for kh in range(3):
        kw_blocks = []
        for kw in range(3):
            left = w1 if (kh == 1 and kw == 1) else zero_c1
            kw_blocks.append(jnp.concatenate([left, w3[kh, kw]], axis=1))
        kh_blocks.append(jnp.concatenate(kw_blocks, axis=0))            # (3C, Cex)
    p['ex_w'] = jnp.stack(kh_blocks, axis=0)                            # (3, 3C, Cex)
    p['ex_b'] = jnp.concatenate([b1, b3], axis=1)                       # (1, Cex)
    return p


def cast_weights(params, dtype):
    """Cast only the matmul weights (biases / BN stay f32)."""
    q = dict(params)
    for k in ('sq_w', 'dec_w', 'ex_w'):
        q[k] = params[k].astype(dtype)
    return q


# ------------------------- pure-JAX reference (NCHW) -----------------------

def _conv_bn_relu_ref(x, w, b, bn, padding):
    y = jax.lax.conv_general_dilated(
        x, w, (1, 1), ((padding, padding), (padding, padding)),
        dimension_numbers=('NCHW', 'OIHW', 'NCHW')) + b[None, :, None, None]
    s, t = bn_scale_shift(bn)
    return jnp.maximum(y * s[None, :, None, None] + t[None, :, None, None], 0.0)


def _deconv_bn_relu_ref(x, w, b, bn):
    # ConvTranspose2d(k=(1,4), s=(1,2), p=(0,1)) == dilated conv w/ flipped kernel
    w_conv = jnp.transpose(w[:, :, ::-1, ::-1], (1, 0, 2, 3))
    y = jax.lax.conv_general_dilated(
        x, w_conv, (1, 1), ((0, 0), (2, 2)), lhs_dilation=(1, 2),
        dimension_numbers=('NCHW', 'OIHW', 'NCHW')) + b[None, :, None, None]
    s, t = bn_scale_shift(bn)
    return jnp.maximum(y * s[None, :, None, None] + t[None, :, None, None], 0.0)


def fire_deconv_ref(x, raw):
    sq = _conv_bn_relu_ref(x, raw['sq_w'], raw['sq_b'], raw['sq_bn'], 0)
    dec = _deconv_bn_relu_ref(sq, raw['dec_w'], raw['dec_b'], raw['dec_bn'])
    e1 = _conv_bn_relu_ref(dec, raw['ex1_w'], raw['ex1_b'], raw['ex1_bn'], 0)
    e3 = _conv_bn_relu_ref(dec, raw['ex3_w'], raw['ex3_b'], raw['ex3_bn'], 1)
    return jnp.concatenate([e1, e3], axis=1)


# ---------------------------------- main ------------------------------------

if __name__ == "__main__":
    key = jax.random.PRNGKey(0)
    kx, kp = jax.random.split(key)
    N, Cin, H, W = 2, 4, 16, 16
    c_sq, c_e1, c_e3 = 8, 8, 8

    x = jax.random.normal(kx, (N, Cin, H, W), jnp.float32)
    raw = make_raw_params(kp, Cin, c_sq, c_e1, c_e3)
    params = fold_params(raw)

    fwd = jax.jit(fire_deconv_forward,
                  static_argnames=("rows_per_block", "out_layout"))
    ref = jax.block_until_ready(fire_deconv_ref(x, raw))

    # f32 path; rows_per_block=8 -> 2 row-blocks per image so both the interior
    # halo path and the image-edge (zero-padding) path are exercised.
    out = jax.block_until_ready(fwd(x, params, rows_per_block=8))
    assert out.shape == (N, c_e1 + c_e3, H, 2 * W), out.shape
    np.testing.assert_allclose(np.asarray(out), np.asarray(ref),
                               atol=1e-4, rtol=1e-4)

    # bf16 MXU path (v5e/v6e/v7x): weights + activations in bf16, bias/ReLU and
    # accumulation in f32; looser tolerance per bf16 rounding.
    out_bf16 = jax.block_until_ready(
        fwd(x, cast_weights(params, jnp.bfloat16), rows_per_block=8))
    np.testing.assert_allclose(np.asarray(out_bf16), np.asarray(ref),
                               atol=3e-2, rtol=3e-2)

    print("KERNEL_OK")
</pallas_src>

<mosaic_0001>
module attributes {stable_mosaic.version = 11 : i64} {
  func.func @_fire_deconv_kernel(%arg0: i32, %arg1: memref<1x32x4xf32, #tpu.memory_space<vmem>>, %arg2: memref<1x128x4xf32, #tpu.memory_space<vmem>>, %arg3: memref<4x8xf32, #tpu.memory_space<vmem>>, %arg4: memref<1x8xf32, #tpu.memory_space<vmem>>, %arg5: memref<8x32xf32, #tpu.memory_space<vmem>>, %arg6: memref<1x8xf32, #tpu.memory_space<vmem>>, %arg7: memref<3x24x16xf32, #tpu.memory_space<vmem>>, %arg8: memref<1x16xf32, #tpu.memory_space<vmem>>, %arg9: memref<1x256x16xf32, #tpu.memory_space<vmem>>) attributes {dimension_semantics = [#tpu.dimension_semantics<parallel>], iteration_bounds = array<i64: 4>, scalar_prefetch = 0 : i64, scratch_operands = 0 : i64, tpu.core_type = #tpu.core_type<tc>, window_params = [{transform_indices = @transform_0, window_bounds = array<i64: 1, 32, 4>}, {transform_indices = @transform_1, window_bounds = array<i64: 1, 128, 4>}, {pipeline_mode = #tpu.pipeline_mode<synchronous>, transform_indices = @transform_2, window_bounds = array<i64: 4, 8>}, {pipeline_mode = #tpu.pipeline_mode<synchronous>, transform_indices = @transform_3, window_bounds = array<i64: 1, 8>}, {pipeline_mode = #tpu.pipeline_mode<synchronous>, transform_indices = @transform_4, window_bounds = array<i64: 8, 32>}, {pipeline_mode = #tpu.pipeline_mode<synchronous>, transform_indices = @transform_5, window_bounds = array<i64: 1, 8>}, {pipeline_mode = #tpu.pipeline_mode<synchronous>, transform_indices = @transform_6, window_bounds = array<i64: 3, 24, 16>}, {pipeline_mode = #tpu.pipeline_mode<synchronous>, transform_indices = @transform_7, window_bounds = array<i64: 1, 16>}, {transform_indices = @transform_8, window_bounds = array<i64: 1, 256, 16>}]} {
    %c0 = arith.constant 0 : index
    %c0_0 = arith.constant 0 : index
    %0 = vector.load %arg4[%c0, %c0_0] : memref<1x8xf32, #tpu.memory_space<vmem>>, vector<1x8xf32>
    %c0_1 = arith.constant 0 : index
    %c0_2 = arith.constant 0 : index
    %c0_3 = arith.constant 0 : index
    %1 = vector.load %arg2[%c0_1, %c0_2, %c0_3] : memref<1x128x4xf32, #tpu.memory_space<vmem>>, vector<1x128x4xf32>
    %2 = vector.shape_cast %1 : vector<1x128x4xf32> to vector<128x4xf32>
    %c0_4 = arith.constant 0 : index
    %c0_5 = arith.constant 0 : index
    %3 = vector.load %arg3[%c0_4, %c0_5] : memref<4x8xf32, #tpu.memory_space<vmem>>, vector<4x8xf32>
    %cst = arith.constant dense<0.000000e+00> : vector<128x8xf32>
    %4 = tpu.matmul %2, %3, %cst {dimension_numbers = #tpu.dot_dimension_numbers<[1], [0], [0], [1], [0, 0, 1, 1], [], []>} : vector<128x4xf32>, vector<4x8xf32>, vector<128x8xf32> -> vector<128x8xf32>
    %5 = vector.broadcast %0 : vector<1x8xf32> to vector<128x8xf32>
    %6 = arith.addf %4, %5 : vector<128x8xf32>
    %cst_6 = arith.constant 0.000000e+00 : f32
    %7 = vector.broadcast %cst_6 : f32 to vector<128x8xf32>
    %8 = arith.maximumf %6, %7 : vector<128x8xf32>
    %c0_7 = arith.constant 0 : index
    %c0_8 = arith.constant 0 : index
    %c0_9 = arith.constant 0 : index
    %9 = vector.load %arg1[%c0_7, %c0_8, %c0_9] : memref<1x32x4xf32, #tpu.memory_space<vmem>>, vector<1x32x4xf32>
    %10 = vector.shape_cast %9 : vector<1x32x4xf32> to vector<32x4xf32>
    %c0_10 = arith.constant 0 : index
    %c0_11 = arith.constant 0 : index
    %11 = vector.load %arg3[%c0_10, %c0_11] : memref<4x8xf32, #tpu.memory_space<vmem>>, vector<4x8xf32>
    %cst_12 = arith.constant dense<0.000000e+00> : vector<32x8xf32>
    %12 = tpu.matmul %10, %11, %cst_12 {dimension_numbers = #tpu.dot_dimension_numbers<[1], [0], [0], [1], [0, 0, 1, 1], [], []>} : vector<32x4xf32>, vector<4x8xf32>, vector<32x8xf32> -> vector<32x8xf32>
    %13 = vector.broadcast %0 : vector<1x8xf32> to vector<32x8xf32>
    %14 = arith.addf %12, %13 : vector<32x8xf32>
    %cst_13 = arith.constant 0.000000e+00 : f32
    %15 = vector.broadcast %cst_13 : f32 to vector<32x8xf32>
    %16 = arith.maximumf %14, %15 : vector<32x8xf32>
    %17 = vector.extract_strided_slice %16 {offsets = [0, 0], sizes = [16, 8], strides = [1, 1]} : vector<32x8xf32> to vector<16x8xf32>
    %18 = vector.extract_strided_slice %16 {offsets = [16, 0], sizes = [16, 8], strides = [1, 1]} : vector<32x8xf32> to vector<16x8xf32>
    %19 = tpu.concatenate %17, %8, %18 in 0 : vector<16x8xf32>, vector<128x8xf32>, vector<16x8xf32> -> vector<160x8xf32>
    %c0_14 = arith.constant 0 : index
    %c0_15 = arith.constant 0 : index
    %20 = vector.load %arg5[%c0_14, %c0_15] : memref<8x32xf32, #tpu.memory_space<vmem>>, vector<8x32xf32>
    %cst_16 = arith.constant dense<0.000000e+00> : vector<160x32xf32>
    %21 = tpu.matmul %19, %20, %cst_16 {dimension_numbers = #tpu.dot_dimension_numbers<[1], [0], [0], [1], [0, 0, 1, 1], [], []>} : vector<160x8xf32>, vector<8x32xf32>, vector<160x32xf32> -> vector<160x32xf32>
    %22 = vector.shape_cast %21 : vector<160x32xf32> to vector<10x16x32xf32>
    %cst_17 = arith.constant 0.000000e+00 : f32
    %23 = vector.broadcast %cst_17 : f32 to vector<10x1x8xf32>
    %24 = vector.extract_strided_slice %22 {offsets = [0, 0, 0], sizes = [10, 15, 8], strides = [1, 1, 1]} : vector<10x16x32xf32> to vector<10x15x8xf32>
    %25 = tpu.concatenate %23, %24 in 1 : vector<10x1x8xf32>, vector<10x15x8xf32> -> vector<10x16x8xf32>
    %26 = vector.extract_strided_slice %22 {offsets = [0, 1, 24], sizes = [10, 15, 8], strides = [1, 1, 1]} : vector<10x16x32xf32> to vector<10x15x8xf32>
    %27 = tpu.concatenate %26, %23 in 1 : vector<10x15x8xf32>, vector<10x1x8xf32> -> vector<10x16x8xf32>
    %c0_18 = arith.constant 0 : index
    %c0_19 = arith.constant 0 : index
    %28 = vector.load %arg6[%c0_18, %c0_19] : memref<1x8xf32, #tpu.memory_space<vmem>>, vector<1x8xf32>
    %29 = vector.extract_strided_slice %22 {offsets = [0, 0, 8], sizes = [10, 16, 8], strides = [1, 1, 1]} : vector<10x16x32xf32> to vector<10x16x8xf32>
    %30 = arith.addf %25, %29 : vector<10x16x8xf32>
    %31 = vector.shape_cast %28 : vector<1x8xf32> to vector<1x1x8xf32>
    %32 = vector.broadcast %31 : vector<1x1x8xf32> to vector<10x16x8xf32>
    %33 = arith.addf %30, %32 : vector<10x16x8xf32>
    %cst_20 = arith.constant 0.000000e+00 : f32
    %34 = vector.broadcast %cst_20 : f32 to vector<10x16x8xf32>
    %35 = arith.maximumf %33, %34 : vector<10x16x8xf32>
    %36 = vector.extract_strided_slice %22 {offsets = [0, 0, 16], sizes = [10, 16, 8], strides = [1, 1, 1]} : vector<10x16x32xf32> to vector<10x16x8xf32>
    %37 = arith.addf %36, %27 : vector<10x16x8xf32>
    %38 = vector.shape_cast %28 : vector<1x8xf32> to vector<1x1x8xf32>
    %39 = vector.broadcast %38 : vector<1x1x8xf32> to vector<10x16x8xf32>
    %40 = arith.addf %37, %39 : vector<10x16x8xf32>
    %cst_21 = arith.constant 0.000000e+00 : f32
    %41 = vector.broadcast %cst_21 : f32 to vector<10x16x8xf32>
    %42 = arith.maximumf %40, %41 : vector<10x16x8xf32>
    %c2_i32 = arith.constant 2 : i32
    %c0_i32 = arith.constant 0 : i32
    %43 = arith.cmpi eq, %c2_i32, %c0_i32 : i32
    %c1_i32 = arith.constant 1 : i32
    %44 = arith.select %43, %c1_i32, %c2_i32 : i32
    %45 = arith.remsi %arg0, %44 : i32
    %c0_i32_22 = arith.constant 0 : i32
    %46 = arith.cmpi ne, %45, %c0_i32_22 : i32
    %c0_i32_23 = arith.constant 0 : i32
    %47 = arith.cmpi slt, %45, %c0_i32_23 : i32
    %c0_i32_24 = arith.constant 0 : i32
    %48 = arith.cmpi slt, %44, %c0_i32_24 : i32
    %49 = arith.xori %47, %48 : i1
    %50 = arith.andi %49, %46 : i1
    %51 = arith.addi %45, %44 : i32
    %52 = arith.select %50, %51, %45 : i32
    %c0_i32_25 = arith.constant 0 : i32
    %53 = arith.cmpi eq, %52, %c0_i32_25 : i32
    %c1_i32_26 = arith.constant 1 : i32
    %c0_i32_27 = arith.constant 0 : i32
    %54 = arith.select %53, %c1_i32_26, %c0_i32_27 : i32
    %c1_i32_28 = arith.constant 1 : i32
    %55 = arith.cmpi eq, %52, %c1_i32_28 : i32
    %c9_i32 = arith.constant 9 : i32
    %c10_i32 = arith.constant 10 : i32
    %56 = arith.select %55, %c9_i32, %c10_i32 : i32
    %57 = tpu.iota {dimensions = array<i32: 0>} : vector<10x1x1xi32>
    %58 = vector.broadcast %54 : i32 to vector<10x1x1xi32>
    %59 = arith.cmpi sge, %57, %58 : vector<10x1x1xi32>
    %60 = vector.broadcast %56 : i32 to vector<10x1x1xi32>
    %61 = arith.cmpi slt, %57, %60 : vector<10x1x1xi32>
    %62 = arith.andi %59, %61 : vector<10x1x1xi1>
    %63 = arith.extui %62 : vector<10x1x1xi1> to vector<10x1x1xi32>
    %64 = arith.sitofp %63 : vector<10x1x1xi32> to vector<10x1x1xf32>
    %65 = vector.broadcast %64 : vector<10x1x1xf32> to vector<10x16x8xf32>
    %66 = arith.mulf %35, %65 : vector<10x16x8xf32>
    %67 = vector.broadcast %64 : vector<10x1x1xf32> to vector<10x16x8xf32>
    %68 = arith.mulf %42, %67 : vector<10x16x8xf32>
    %69 = vector.extract_strided_slice %68 {offsets = [0, 0, 0], sizes = [10, 15, 8], strides = [1, 1, 1]} : vector<10x16x8xf32> to vector<10x15x8xf32>
    %70 = tpu.concatenate %23, %69 in 1 : vector<10x1x8xf32>, vector<10x15x8xf32> -> vector<10x16x8xf32>
    %71 = vector.extract_strided_slice %66 {offsets = [0, 1, 0], sizes = [10, 15, 8], strides = [1, 1, 1]} : vector<10x16x8xf32> to vector<10x15x8xf32>
    %72 = tpu.concatenate %71, %23 in 1 : vector<10x15x8xf32>, vector<10x1x8xf32> -> vector<10x16x8xf32>
    %73 = tpu.concatenate %70, %66, %68 in 2 : vector<10x16x8xf32>, vector<10x16x8xf32>, vector<10x16x8xf32> -> vector<10x16x24xf32>
    %74 = tpu.concatenate %66, %68, %72 in 2 : vector<10x16x8xf32>, vector<10x16x8xf32>, vector<10x16x8xf32> -> vector<10x16x24xf32>
    %75 = vector.shape_cast %73 : vector<10x16x24xf32> to vector<1x10x16x24xf32>
    %76 = vector.shape_cast %74 : vector<10x16x24xf32> to vector<1x10x16x24xf32>
    %77 = tpu.concatenate %75, %76 in 0 : vector<1x10x16x24xf32>, vector<1x10x16x24xf32> -> vector<2x10x16x24xf32>
    %cst_29 = arith.constant 0.000000e+00 : f32
    %78 = vector.broadcast %cst_29 : f32 to vector<256x16xf32>
    %79 = vector.extract_strided_slice %77 {offsets = [0, 0, 0, 0], sizes = [2, 8, 16, 24], strides = [1, 1, 1, 1]} : vector<2x10x16x24xf32> to vector<2x8x16x24xf32>
    %80 = vector.shape_cast %79 : vector<2x8x16x24xf32> to vector<256x24xf32>
    %c0_30 = arith.constant 0 : index
    %c0_31 = arith.constant 0 : index
    %c0_32 = arith.constant 0 : index
    %81 = vector.load %arg7[%c0_30, %c0_31, %c0_32] : memref<3x24x16xf32, #tpu.memory_space<vmem>>, vector<1x24x16xf32>
    %82 = vector.shape_cast %81 : vector<1x24x16xf32> to vector<24x16xf32>
    %cst_33 = arith.constant dense<0.000000e+00> : vector<256x16xf32>
    %83 = tpu.matmul %80, %82, %cst_33 {dimension_numbers = #tpu.dot_dimension_numbers<[1], [0], [0], [1], [0, 0, 1, 1], [], []>} : vector<256x24xf32>, vector<24x16xf32>, vector<256x16xf32> -> vector<256x16xf32>
    %84 = arith.addf %78, %83 : vector<256x16xf32>
    %85 = vector.extract_strided_slice %77 {offsets = [0, 1, 0, 0], sizes = [2, 8, 16, 24], strides = [1, 1, 1, 1]} : vector<2x10x16x24xf32> to vector<2x8x16x24xf32>
    %86 = vector.shape_cast %85 : vector<2x8x16x24xf32> to vector<256x24xf32>
    %c1 = arith.constant 1 : index
    %c0_34 = arith.constant 0 : index
    %c0_35 = arith.constant 0 : index
    %87 = vector.load %arg7[%c1, %c0_34, %c0_35] : memref<3x24x16xf32, #tpu.memory_space<vmem>>, vector<1x24x16xf32>
    %88 = vector.shape_cast %87 : vector<1x24x16xf32> to vector<24x16xf32>
    %cst_36 = arith.constant dense<0.000000e+00> : vector<256x16xf32>
    %89 = tpu.matmul %86, %88, %cst_36 {dimension_numbers = #tpu.dot_dimension_numbers<[1], [0], [0], [1], [0, 0, 1, 1], [], []>} : vector<256x24xf32>, vector<24x16xf32>, vector<256x16xf32> -> vector<256x16xf32>
    %90 = arith.addf %84, %89 : vector<256x16xf32>
    %91 = vector.extract_strided_slice %77 {offsets = [0, 2, 0, 0], sizes = [2, 8, 16, 24], strides = [1, 1, 1, 1]} : vector<2x10x16x24xf32> to vector<2x8x16x24xf32>
    %92 = vector.shape_cast %91 : vector<2x8x16x24xf32> to vector<256x24xf32>
    %c2 = arith.constant 2 : index
    %c0_37 = arith.constant 0 : index
    %c0_38 = arith.constant 0 : index
    %93 = vector.load %arg7[%c2, %c0_37, %c0_38] : memref<3x24x16xf32, #tpu.memory_space<vmem>>, vector<1x24x16xf32>
    %94 = vector.shape_cast %93 : vector<1x24x16xf32> to vector<24x16xf32>
    %cst_39 = arith.constant dense<0.000000e+00> : vector<256x16xf32>
    %95 = tpu.matmul %92, %94, %cst_39 {dimension_numbers = #tpu.dot_dimension_numbers<[1], [0], [0], [1], [0, 0, 1, 1], [], []>} : vector<256x24xf32>, vector<24x16xf32>, vector<256x16xf32> -> vector<256x16xf32>
    %96 = arith.addf %90, %95 : vector<256x16xf32>
    %c0_40 = arith.constant 0 : index
    %c0_41 = arith.constant 0 : index
    %97 = vector.load %arg8[%c0_40, %c0_41] : memref<1x16xf32, #tpu.memory_space<vmem>>, vector<1x16xf32>
    %98 = vector.broadcast %97 : vector<1x16xf32> to vector<256x16xf32>
    %99 = arith.addf %96, %98 : vector<256x16xf32>
    %cst_42 = arith.constant 0.000000e+00 : f32
    %100 = vector.broadcast %cst_42 : f32 to vector<256x16xf32>
    %101 = arith.maximumf %99, %100 : vector<256x16xf32>
    %102 = vector.shape_cast %101 : vector<256x16xf32> to vector<1x256x16xf32>
    %c0_43 = arith.constant 0 : index
    %c0_44 = arith.constant 0 : index
    %c0_45 = arith.constant 0 : index
    %103 = vector.load %arg9[%c0_43, %c0_44, %c0_45] : memref<1x256x16xf32, #tpu.memory_space<vmem>>, vector<1x256x16xf32>
    tpu.vector_store %arg9[%c0_43, %c0_44, %c0_45], %102 {strides = array<i32>} : memref<1x256x16xf32, #tpu.memory_space<vmem>>, vector<1x256x16xf32>,
    return
  }
  func.func @transform_0(%arg0: i32) -> (i32, i32, i32) {
    %c0_i32 = arith.constant 0 : i32
    %c0_i32_0 = arith.constant 0 : i32
    %c0_i32_1 = arith.constant 0 : i32
    return %arg0, %c0_i32, %c0_i32_0 : i32, i32, i32
  }
  func.func @transform_1(%arg0: i32) -> (i32, i32, i32) {
    %c0_i32 = arith.constant 0 : i32
    %c0_i32_0 = arith.constant 0 : i32
    %c0_i32_1 = arith.constant 0 : i32
    return %arg0, %c0_i32, %c0_i32_0 : i32, i32, i32
  }
  func.func @transform_2(%arg0: i32) -> (i32, i32) {
    %c0_i32 = arith.constant 0 : i32
    %c0_i32_0 = arith.constant 0 : i32
    %c0_i32_1 = arith.constant 0 : i32
    return %c0_i32, %c0_i32_0 : i32, i32
  }
  func.func @transform_3(%arg0: i32) -> (i32, i32) {
    %c0_i32 = arith.constant 0 : i32
    %c0_i32_0 = arith.constant 0 : i32
    %c0_i32_1 = arith.constant 0 : i32
    return %c0_i32, %c0_i32_0 : i32, i32
  }
  func.func @transform_4(%arg0: i32) -> (i32, i32) {
    %c0_i32 = arith.constant 0 : i32
    %c0_i32_0 = arith.constant 0 : i32
    %c0_i32_1 = arith.constant 0 : i32
    return %c0_i32, %c0_i32_0 : i32, i32
  }
  func.func @transform_5(%arg0: i32) -> (i32, i32) {
    %c0_i32 = arith.constant 0 : i32
    %c0_i32_0 = arith.constant 0 : i32
    %c0_i32_1 = arith.constant 0 : i32
    return %c0_i32, %c0_i32_0 : i32, i32
  }
  func.func @transform_6(%arg0: i32) -> (i32, i32, i32) {
    %c0_i32 = arith.constant 0 : i32
    %c0_i32_0 = arith.constant 0 : i32
    %c0_i32_1 = arith.constant 0 : i32
    %c0_i32_2 = arith.constant 0 : i32
    return %c0_i32, %c0_i32_0, %c0_i32_1 : i32, i32, i32
  }
  func.func @transform_7(%arg0: i32) -> (i32, i32) {
    %c0_i32 = arith.constant 0 : i32
    %c0_i32_0 = arith.constant 0 : i32
    %c0_i32_1 = arith.constant 0 : i32
    return %c0_i32, %c0_i32_0 : i32, i32
  }
  func.func @transform_8(%arg0: i32) -> (i32, i32, i32) {
    %c0_i32 = arith.constant 0 : i32
    %c0_i32_0 = arith.constant 0 : i32
    %c0_i32_1 = arith.constant 0 : i32
    return %arg0, %c0_i32, %c0_i32_0 : i32, i32, i32
  }
}

</mosaic_0001>

<llo_original>
// kernel: fire_deconv_forward.1
$region0: #{fire_deconv_forward.1}
  #allocation0 [shape = 'u32[]', space=smem, size = 0x4, offset = 0x4, fixed_abs, tag = 'smem constant byte address 0x4 - core index']
  #allocation1 [shape = 'u32[144,128]{1,0:T(1,128)}', space=vmem, size = 0x12000, scoped, tag = 'internal scratch']
  %s0 = inlined_call_operand.vmem [shape: f32[4,32,4], index: 0, kind: input, shape index: {}]
  %s1 = inlined_call_operand.vmem [shape: f32[4,128,4], index: 1, kind: input, shape index: {}]
  %s2 = inlined_call_operand.vmem [shape: f32[4,8], index: 2, kind: input, shape index: {}]
  %s3 = inlined_call_operand.vmem [shape: f32[1,8], index: 3, kind: input, shape index: {}]
  %s4 = inlined_call_operand.vmem [shape: f32[8,32], index: 4, kind: input, shape index: {}]
  %s5 = inlined_call_operand.vmem [shape: f32[1,8], index: 5, kind: input, shape index: {}]
  %s6 = inlined_call_operand.vmem [shape: f32[3,24,16], index: 6, kind: input, shape index: {}]
  %s7 = inlined_call_operand.vmem [shape: f32[1,16], index: 7, kind: input, shape index: {}]
  %s8 = inlined_call_operand.vmem [shape: f32[4,256,16], index: 8, kind: output, shape index: {}]
  %s9 = sld [smem:[#allocation0]]
  $region65: #{fire_deconv_forward.1} parent=0
    _
  %s11 = ssub.s32 1, %s9
  %s12 = scalar_select 0, %s11, %s9
  loop: start=0, step=1, limit=6
  $region2: #{fire_deconv_forward.1} parent=0 // loop_pre_header
    _
  $region3: #{fire_deconv_forward.1} parent=0 // loop_header
    %s14 = sphi 0, %s18
    %p15 = scmp.ge.s32.totalorder %s14, 6
    %s24 = sphi 0, %s26
    %s27 = sphi 0, %s24
    %s28 = sphi 0, %s27
    %s44 = sphi 0, %s28
    %s50 = sphi 0, %s52
    %s53 = sphi 0, %s50
    %s54 = sphi 0, %s53
    %s70 = sphi 0, %s54
    %s74 = sphi 0, %s74
    %s76 = sphi 0, %s74
    %s77 = sphi 0, %s76
    %s91 = sphi 0, %s77
    %s95 = sphi 0, %s95
    %s97 = sphi 0, %s95
    %s98 = sphi 0, %s97
    %s112 = sphi 0, %s98
    %s116 = sphi 0, %s116
    %s118 = sphi 0, %s116
    %s119 = sphi 0, %s118
    %s133 = sphi 0, %s119
    %s137 = sphi 0, %s137
    %s139 = sphi 0, %s137
    %s140 = sphi 0, %s139
    %s154 = sphi 0, %s140
    %s158 = sphi 0, %s158
    %s160 = sphi 0, %s158
    %s161 = sphi 0, %s160
    %s175 = sphi 0, %s161
    %s179 = sphi 0, %s179
    %s181 = sphi 0, %s179
    %s182 = sphi 0, %s181
    %s196 = sphi 0, %s182
    %s202 = sphi 0, %s204
    %s205 = sphi 0, %s202
    %s206 = sphi 0, %s205
    %s222 = sphi 0, %s206
  $region4: #{fire_deconv_forward.1} parent=0 // loop_header_branch
    %17 = sbr.rel (%p15) target = $region8
  $region5: #{fire_deconv_forward.1} parent=0 // loop_body
    %s19 = ssub.s32 %s14, 1
    %s20 = ssub.s32 %s14, 2
    %s21 = sadd.s32 %s14, 1
    %s22 = ssub.s32 %s14, %s21
    %p23 = scmp.eq.s32.totalorder %s22, 0
    %s25 = sadd.s32 %s24, 1
    %s26 = scalar_select %p23, %s24, %s25
    %p29 = pneg %p23
    %p30 = scmp.eq.s32.totalorder %s14, 3
    %p31 = por %p29, %p30
    %p32 = scmp.ne.s32.totalorder %s24, %s27
    %p33 = scmp.eq.s32.totalorder %s14, 0
    %p34 = por %p32, %p33
    %p35 = scmp.ne.s32.totalorder %s24, %s27
    %p36 = scmp.eq.s32.totalorder %s19, 3
    %p37 = por %p35, %p36
    %p38 = scmp.ne.s32.totalorder %s27, %s28
    %p39 = scmp.eq.s32.totalorder %s19, 0
    %p40 = por %p38, %p39
    %p41 = scmp.ne.s32.totalorder %s27, %s28
    %p42 = scmp.eq.s32.totalorder %s20, 3
    %p43 = por %p41, %p42
    %p45 = scmp.ne.s32.totalorder %s28, %s44
    %p46 = scmp.eq.s32.totalorder %s20, 0
    %p47 = por %p45, %p46
    %s48 = ssub.s32 %s14, %s21
    %p49 = scmp.eq.s32.totalorder %s48, 0
    %s51 = sadd.s32 %s50, 1
    %s52 = scalar_select %p49, %s50, %s51
    %p55 = pneg %p49
    %p56 = scmp.eq.s32.totalorder %s14, 3
    %p57 = por %p55, %p56
    %p58 = scmp.ne.s32.totalorder %s50, %s53
    %p59 = scmp.eq.s32.totalorder %s14, 0
    %p60 = por %p58, %p59
    %p61 = scmp.ne.s32.totalorder %s50, %s53
    %p62 = scmp.eq.s32.totalorder %s19, 3
    %p63 = por %p61, %p62
    %p64 = scmp.ne.s32.totalorder %s53, %s54
    %p65 = scmp.eq.s32.totalorder %s19, 0
    %p66 = por %p64, %p65
    %p67 = scmp.ne.s32.totalorder %s53, %s54
    %p68 = scmp.eq.s32.totalorder %s20, 3
    %p69 = por %p67, %p68
    %p71 = scmp.ne.s32.totalorder %s54, %s70
    %p72 = scmp.eq.s32.totalorder %s20, 0
    %p73 = por %p71, %p72
    %s75 = sadd.s32 %s74, 1
    %p78 = scmp.eq.s32.totalorder %s14, 3
    %p79 = scmp.ne.s32.totalorder %s74, %s76
    %p80 = scmp.eq.s32.totalorder %s14, 0
    %p81 = por %p79, %p80
    %p82 = scmp.ne.s32.totalorder %s74, %s76
    %p83 = scmp.eq.s32.totalorder %s19, 3
    %p84 = por %p82, %p83
    %p85 = scmp.ne.s32.totalorder %s76, %s77
    %p86 = scmp.eq.s32.totalorder %s19, 0
    %p87 = por %p85, %p86
    %p88 = scmp.ne.s32.totalorder %s76, %s77
    %p89 = scmp.eq.s32.totalorder %s20, 3
    %p90 = por %p88, %p89
    %p92 = scmp.ne.s32.totalorder %s77, %s91
    %p93 = scmp.eq.s32.totalorder %s20, 0
    %p94 = por %p92, %p93
    %s96 = sadd.s32 %s95, 1
    %p99 = scmp.eq.s32.totalorder %s14, 3
    %p100 = scmp.ne.s32.totalorder %s95, %s97
    %p101 = scmp.eq.s32.totalorder %s14, 0
    %p102 = por %p100, %p101
    %p103 = scmp.ne.s32.totalorder %s95, %s97
    %p104 = scmp.eq.s32.totalorder %s19, 3
    %p105 = por %p103, %p104
    %p106 = scmp.ne.s32.totalorder %s97, %s98
    %p107 = scmp.eq.s32.totalorder %s19, 0
    %p108 = por %p106, %p107
    %p109 = scmp.ne.s32.totalorder %s97, %s98
    %p110 = scmp.eq.s32.totalorder %s20, 3
    %p111 = por %p109, %p110
    %p113 = scmp.ne.s32.totalorder %s98, %s112
    %p114 = scmp.eq.s32.totalorder %s20, 0
    %p115 = por %p113, %p114
    %s117 = sadd.s32 %s116, 1
    %p120 = scmp.eq.s32.totalorder %s14, 3
    %p121 = scmp.ne.s32.totalorder %s116, %s118
    %p122 = scmp.eq.s32.totalorder %s14, 0
    %p123 = por %p121, %p122
    %p124 = scmp.ne.s32.totalorder %s116, %s118
    %p125 = scmp.eq.s32.totalorder %s19, 3
    %p126 = por %p124, %p125
    %p127 = scmp.ne.s32.totalorder %s118, %s119
    %p128 = scmp.eq.s32.totalorder %s19, 0
    %p129 = por %p127, %p128
    %p130 = scmp.ne.s32.totalorder %s118, %s119
    %p131 = scmp.eq.s32.totalorder %s20, 3
    %p132 = por %p130, %p131
    %p134 = scmp.ne.s32.totalorder %s119, %s133
    %p135 = scmp.eq.s32.totalorder %s20, 0
    %p136 = por %p134, %p135
    %s138 = sadd.s32 %s137, 1
    %p141 = scmp.eq.s32.totalorder %s14, 3
    %p142 = scmp.ne.s32.totalorder %s137, %s139
    %p143 = scmp.eq.s32.totalorder %s14, 0
    %p144 = por %p142, %p143
    %p145 = scmp.ne.s32.totalorder %s137, %s139
    %p146 = scmp.eq.s32.totalorder %s19, 3
    %p147 = por %p145, %p146
    %p148 = scmp.ne.s32.totalorder %s139, %s140
    %p149 = scmp.eq.s32.totalorder %s19, 0
    %p150 = por %p148, %p149
    %p151 = scmp.ne.s32.totalorder %s139, %s140
    %p152 = scmp.eq.s32.totalorder %s20, 3
    %p153 = por %p151, %p152
    %p155 = scmp.ne.s32.totalorder %s140, %s154
    %p156 = scmp.eq.s32.totalorder %s20, 0
    %p157 = por %p155, %p156
    %s159 = sadd.s32 %s158, 1
    %p162 = scmp.eq.s32.totalorder %s14, 3
    %p163 = scmp.ne.s32.totalorder %s158, %s160
    %p164 = scmp.eq.s32.totalorder %s14, 0
    %p165 = por %p163, %p164
    %p166 = scmp.ne.s32.totalorder %s158, %s160
    %p167 = scmp.eq.s32.totalorder %s19, 3
    %p168 = por %p166, %p167
    %p169 = scmp.ne.s32.totalorder %s160, %s161
    %p170 = scmp.eq.s32.totalorder %s19, 0
    %p171 = por %p169, %p170
    %p172 = scmp.ne.s32.totalorder %s160, %s161
    %p173 = scmp.eq.s32.totalorder %s20, 3
    %p174 = por %p172, %p173
    %p176 = scmp.ne.s32.totalorder %s161, %s175
    %p177 = scmp.eq.s32.totalorder %s20, 0
    %p178 = por %p176, %p177
    %s180 = sadd.s32 %s179, 1
    %p183 = scmp.eq.s32.totalorder %s14, 3
    %p184 = scmp.ne.s32.totalorder %s179, %s181
    %p185 = scmp.eq.s32.totalorder %s14, 0
    %p186 = por %p184, %p185
    %p187 = scmp.ne.s32.totalorder %s179, %s181
    %p188 = scmp.eq.s32.totalorder %s19, 3
    %p189 = por %p187, %p188
    %p190 = scmp.ne.s32.totalorder %s181, %s182
    %p191 = scmp.eq.s32.totalorder %s19, 0
    %p192 = por %p190, %p191
    %p193 = scmp.ne.s32.totalorder %s181, %s182
    %p194 = scmp.eq.s32.totalorder %s20, 3
    %p195 = por %p193, %p194
    %p197 = scmp.ne.s32.totalorder %s182, %s196
    %p198 = scmp.eq.s32.totalorder %s20, 0
    %p199 = por %p197, %p198
    %s200 = ssub.s32 %s14, %s21
    %p201 = scmp.eq.s32.totalorder %s200, 0
    %s203 = sadd.s32 %s202, 1
    %s204 = scalar_select %p201, %s202, %s203
    %p207 = pneg %p201
    %p208 = scmp.eq.s32.totalorder %s14, 3
    %p209 = por %p207, %p208
    %p210 = scmp.ne.s32.totalorder %s202, %s205
    %p211 = scmp.eq.s32.totalorder %s14, 0
    %p212 = por %p210, %p211
    %p213 = scmp.ne.s32.totalorder %s202, %s205
    %p214 = scmp.eq.s32.totalorder %s19, 3
    %p215 = por %p213, %p214
    %p216 = scmp.ne.s32.totalorder %s205, %s206
    %p217 = scmp.eq.s32.totalorder %s19, 0
    %p218 = por %p216, %p217
    %p219 = scmp.ne.s32.totalorder %s205, %s206
    %p220 = scmp.eq.s32.totalorder %s20, 3
    %p221 = por %p219, %p220
    %p223 = scmp.ne.s32.totalorder %s206, %s222
    %p224 = scmp.eq.s32.totalorder %s20, 0
    %p225 = por %p223, %p224
    %p226 = scmp.le.s32.totalorder 1, %s14
    %p227 = scmp.lt.s32.totalorder %s14, 5
    %p228 = pnand %p226, %p227
    %p229 = pneg %p228
    // Predicated region
    $region9: #{fire_deconv_forward.1} parent=5 // pred_check
      _
    $region10: #{fire_deconv_forward.1} parent=5 // pred_check_branch
      %231 = sbr.rel (%p228) target = $region12
    $region11: #{fire_deconv_forward.1} parent=5 // pred_region
      %s232 = ssub.s32 %s14, 1
      // Predicated region
      $region13: #{fire_deconv_forward.1} parent=11 // pred_check
        %p233 = pneg %p87
      $region14: #{fire_deconv_forward.1} parent=11 // pred_check_branch
        %235 = sbr.rel (%p233) target = $region16
      $region15: #{fire_deconv_forward.1} parent=11 // pred_region
        _
      $region16: #{fire_deconv_forward.1} parent=11 // pred_fallthru
        _
      // Predicated region
      $region17: #{fire_deconv_forward.1} parent=11 // pred_check
        %p236 = pneg %p108
      $region18: #{fire_deconv_forward.1} parent=11 // pred_check_branch
        %238 = sbr.rel (%p236) target = $region20
      $region19: #{fire_deconv_forward.1} parent=11 // pred_region
        _
      $region20: #{fire_deconv_forward.1} parent=11 // pred_fallthru
        _
      // Predicated region
      $region21: #{fire_deconv_forward.1} parent=11 // pred_check
        %p239 = pneg %p129
      $region22: #{fire_deconv_forward.1} parent=11 // pred_check_branch
        %241 = sbr.rel (%p239) target = $region24
      $region23: #{fire_deconv_forward.1} parent=11 // pred_region
        _
      $region24: #{fire_deconv_forward.1} parent=11 // pred_fallthru
        _
      // Predicated region
      $region25: #{fire_deconv_forward.1} parent=11 // pred_check
        %p242 = pneg %p150
      $region26: #{fire_deconv_forward.1} parent=11 // pred_check_branch
        %244 = sbr.rel (%p242) target = $region28
      $region27: #{fire_deconv_forward.1} parent=11 // pred_region
        _
      $region28: #{fire_deconv_forward.1} parent=11 // pred_fallthru
        _
      // Predicated region
      $region29: #{fire_deconv_forward.1} parent=11 // pred_check
        %p245 = pneg %p171
      $region30: #{fire_deconv_forward.1} parent=11 // pred_check_branch
        %247 = sbr.rel (%p245) target = $region32
      $region31: #{fire_deconv_forward.1} parent=11 // pred_region
        _
      $region32: #{fire_deconv_forward.1} parent=11 // pred_fallthru
        _
      // Predicated region
      $region33: #{fire_deconv_forward.1} parent=11 // pred_check
        %p248 = pneg %p192
      $region34: #{fire_deconv_forward.1} parent=11 // pred_check_branch
        %250 = sbr.rel (%p248) target = $region36
      $region35: #{fire_deconv_forward.1} parent=11 // pred_region
        _
      $region36: #{fire_deconv_forward.1} parent=11 // pred_fallthru
        _
    $region12: #{fire_deconv_forward.1} parent=5 // pred_fallthru
      _
    %p251 = scmp.lt.s32.totalorder %s14, 4
    // Predicated region
    $region37: #{fire_deconv_forward.1} parent=5 // pred_check
      %p252 = pneg %p251
    $region38: #{fire_deconv_forward.1} parent=5 // pred_check_branch
      %254 = sbr.rel (%p252) target = $region40
    $region39: #{fire_deconv_forward.1} parent=5 // pred_region
      // Predicated region
      $region41: #{fire_deconv_forward.1} parent=39 // pred_check
        %p255 = pneg %p34
      $region42: #{fire_deconv_forward.1} parent=39 // pred_check_branch
        %257 = sbr.rel (%p255) target = $region44
      $region43: #{fire_deconv_forward.1} parent=39 // pred_region
        %p258 = scmp.lt.s32.totalorder %s14, 3
        %s259 = scalar_select %p258, %s14, 3
        %s260 = smul.addr %s259, 4
        %s261 = smul.addr %s260, 8
        %s262 = scalar_lea.vmem %s0, %s261
      $region44: #{fire_deconv_forward.1} parent=39 // pred_fallthru
        _
      // Predicated region
      $region45: #{fire_deconv_forward.1} parent=39 // pred_check
        %p263 = pneg %p60
      $region46: #{fire_deconv_forward.1} parent=39 // pred_check_branch
        %265 = sbr.rel (%p263) target = $region48
      $region47: #{fire_deconv_forward.1} parent=39 // pred_region
        %p266 = scmp.lt.s32.totalorder %s14, 3
        %s267 = scalar_select %p266, %s14, 3
        %s268 = smul.addr %s267, 16
        %s269 = smul.addr %s268, 8
        %s270 = scalar_lea.vmem %s1, %s269
      $region48: #{fire_deconv_forward.1} parent=39 // pred_fallthru
        _
    $region40: #{fire_deconv_forward.1} parent=5 // pred_fallthru
      _
    %p271 = scmp.le.s32.totalorder 1, %s14
    %p272 = scmp.lt.s32.totalorder %s14, 5
    %p273 = pnand %p271, %p272
    %p274 = pneg %p273
    // Predicated region
    $region49: #{fire_deconv_forward.1} parent=5 // pred_check
      _
    $region50: #{fire_deconv_forward.1} parent=5 // pred_check_branch
      %276 = sbr.rel (%p273) target = $region52
    $region51: #{fire_deconv_forward.1} parent=5 // pred_region
      %s277 = ssub.s32 %s14, 1
      %p278 = scmp.lt.s32.totalorder %s19, 3
      %s279 = scalar_select %p278, %s19, 3
      %s280 = smul.addr %s279, 4
      %s281 = smul.addr %s280, 8
      %s282 = scalar_lea.vmem %s0, %s281
      %p283 = pneg %p40
      %p284 = pneg %p37
      %p285 = scmp.lt.s32.totalorder %s19, 3
      %s286 = scalar_select %p285, %s19, 3
      %s287 = smul.addr %s286, 16
      %s288 = smul.addr %s287, 8
      %s289 = scalar_lea.vmem %s1, %s288
      %p290 = pneg %p66
      %p291 = pneg %p63
      %p292 = pneg %p87
      %p293 = pneg %p84
      %p294 = pneg %p108
      %p295 = pneg %p105
      %p296 = pneg %p129
      %p297 = pneg %p126
      %p298 = pneg %p150
      %p299 = pneg %p147
      %p300 = pneg %p171
      %p301 = pneg %p168
      %p302 = pneg %p192
      %p303 = pneg %p189
      %p304 = pneg %p218
      %p305 = pneg %p215
      %p306 = scmp.lt.s32.totalorder %s19, 3
      %s307 = scalar_select %p306, %s19, 3
      %s308 = smul.addr %s307, 32
      %s309 = smul.addr %s308, 8
      %s310 = scalar_lea.vmem %s8, %s309
      %p311 = scmp.lt.s32.totalorder %s19, 3
      %s312 = scalar_select %p311, %s19, 3
      %s313 = smul.addr %s312, 4
      %s314 = smul.addr %s313, 8
      %s315 = scalar_lea.vmem %s0, %s314
      %p316 = scmp.lt.s32.totalorder %s19, 3
      %s317 = scalar_select %p316, %s19, 3
      %s318 = smul.addr %s317, 16
      %s319 = smul.addr %s318, 8
      %s320 = scalar_lea.vmem %s1, %s319
      %p321 = scmp.lt.s32.totalorder %s19, 3
      %s322 = scalar_select %p321, %s19, 3
      %s323 = smul.addr %s322, 32
      %s324 = smul.addr %s323, 8
      %s325 = scalar_lea.vmem %s8, %s324
      %v326 = vld [vmem:[%s3] sm:$0x1]
      %v327 = vld [vmem:[%s320] sm:$0xff]
      %v328 = vld [vmem:[%s320 + $0x8] sm:$0xff]
      %v329 = vld [vmem:[%s320 + $0x10] sm:$0xff]
      %v330 = vld [vmem:[%s320 + $0x18] sm:$0xff]
      %v331 = vld [vmem:[%s320 + $0x20] sm:$0xff]
      %v332 = vld [vmem:[%s320 + $0x28] sm:$0xff]
      %v333 = vld [vmem:[%s320 + $0x30] sm:$0xff]
      %v334 = vld [vmem:[%s320 + $0x38] sm:$0xff]
      %v335 = vld [vmem:[%s320 + $0x40] sm:$0xff]
      %v336 = vld [vmem:[%s320 + $0x48] sm:$0xff]
      %v337 = vld [vmem:[%s320 + $0x50] sm:$0xff]
      %v338 = vld [vmem:[%s320 + $0x58] sm:$0xff]
      %v339 = vld [vmem:[%s320 + $0x60] sm:$0xff]
      %v340 = vld [vmem:[%s320 + $0x68] sm:$0xff]
      %v341 = vld [vmem:[%s320 + $0x70] sm:$0xff]
      %v342 = vld [vmem:[%s320 + $0x78] sm:$0xff]
      %v343 = vld [vmem:[%s2] sm:$0xf]
      %v345 = vlaneseq
      %v346 = vshrl.u32 %v345, 7
      %v347 = vsub.s32 0, %v346
      %v348 = vrot.slane %v326, %v347
      %vm350 = vcmask 31744
      %v352 = vsel %vm350, %v327, 0
      %v355 = vsel %vm350, %v328, 0
      %v358 = vsel %vm350, %v329, 0
      %v361 = vsel %vm350, %v330, 0
      %v364 = vsel %vm350, %v331, 0
      %v367 = vsel %vm350, %v332, 0
      %v370 = vsel %vm350, %v333, 0
      %v373 = vsel %vm350, %v334, 0
      %v376 = vsel %vm350, %v335, 0
      %v379 = vsel %vm350, %v336, 0
      %v382 = vsel %vm350, %v337, 0
      %v385 = vsel %vm350, %v338, 0
      %v388 = vsel %vm350, %v339, 0
      %v391 = vsel %vm350, %v340, 0
      %v394 = vsel %vm350, %v341, 0
      %v397 = vsel %vm350, %v342, 0
      %vm399 = vcmask 1043456
      %v401 = vsel %vm399, %v343, 0
      %403 = vmatprep.subr.mxu0 0.0
      %404 = vmatpush1.msra.mxu0 %v401
      %405 = vmatprep.subr.mxu0 0.0
      %406 = vmatpush1.msra.mxu0 0.0
      %407 = vmatprep.subr.mxu0 0.0
      %408 = vmatpush1.msra.mxu0 0.0
      %409 = vmatprep.subr.mxu0 0.0
      %410 = vmatpush1.msra.mxu0 0.0
      %411 = vmatprep.subr.mxu0 0.0
      %412 = vmatpush1.msra.mxu0 0.0
      %413 = vmatprep.subr.mxu0 0.0
      %414 = vmatpush1.msra.mxu0 0.0
      %415 = vmatprep.subr.mxu0 0.0
      %416 = vmatpush1.msra.mxu0 0.0
      %417 = vmatprep.subr.mxu0 0.0
      %418 = vmatpush1.msra.mxu0 0.0
      %419 = vmatprep.subr.mxu0 0.0
      %420 = vmatpush1.msra.mxu0 0.0
      %421 = vmatprep.subr.mxu0 0.0
      %422 = vmatpush1.msra.mxu0 0.0
      %423 = vmatprep.subr.mxu0 0.0
      %424 = vmatpush1.msra.mxu0 0.0
      %425 = vmatprep.subr.mxu0 0.0
      %426 = vmatpush1.msra.mxu0 0.0
      %427 = vmatprep.subr.mxu0 0.0
      %428 = vmatpush1.msra.mxu0 0.0
      %429 = vmatprep.subr.mxu0 0.0
      %430 = vmatpush1.msra.mxu0 0.0
      %431 = vmatprep.subr.mxu0 0.0
      %432 = vmatpush1.msra.mxu0 0.0
      %433 = vmatprep.subr.mxu0 0.0
      %434 = vmatpush1.msra.mxu0 0.0
      %435 = vmatprep.subr.mxu0 0.0
      %436 = vmatpush1.msra.mxu0 0.0
      %437 = vmatprep.subr.mxu0 0.0
      %438 = vmatpush1.msra.mxu0 0.0
      %439 = vmatprep.subr.mxu0 0.0
      %440 = vmatpush1.msra.mxu0 0.0
      %441 = vmatprep.subr.mxu0 0.0
      %442 = vmatpush1.msra.mxu0 0.0
      %443 = vmatprep.subr.mxu0 0.0
      %444 = vmatpush1.msra.mxu0 0.0
      %445 = vmatprep.subr.mxu0 0.0
      %446 = vmatpush1.msra.mxu0 0.0
      %447 = vmatprep.subr.mxu0 0.0
      %448 = vmatpush1.msra.mxu0 0.0
      %449 = vmatprep.subr.mxu0 0.0
      %450 = vmatpush1.msra.mxu0 0.0
      %451 = vmatprep.subr.mxu0 0.0
      %452 = vmatpush1.msra.mxu0 0.0
      %453 = vmatprep.subr.mxu0 0.0
      %454 = vmatpush1.msra.mxu0 0.0
      %455 = vmatprep.subr.mxu0 0.0
      %456 = vmatpush1.msra.mxu0 0.0
      %457 = vmatprep.subr.mxu0 0.0
      %458 = vmatpush1.msra.mxu0 0.0
      %459 = vmatprep.subr.mxu0 0.0
      %460 = vmatpush1.msra.mxu0 0.0
      %461 = vmatprep.subr.mxu0 0.0
      %462 = vmatpush1.msra.mxu0 0.0
      %463 = vmatprep.subr.mxu0 0.0
      %464 = vmatpush1.msra.mxu0 0.0
      %465 = vmatprep.subr.mxu0 0.0
      %466 = vmatpush1.msra.mxu0 0.0
      %467 = vmatprep.mubr.f32.mxu0 0.0
      %468 = vmatmul.mubr.f32.gmra.mrb[0].mxu0 %v352
      %v469 = vpop.f32.mrb[0].mxu0
      %v470 = vadd.f32 %v348, %v469
      %v471 = vpop.f32.mrb[0].mxu0
      %472 = vmatprep.mubr.f32.mxu0 0.0
      %473 = vmatmul.mubr.f32.gmra.mrb[0].mxu0 %v355
      %v474 = vpop.f32.mrb[0].mxu0
      %v475 = vadd.f32 %v348, %v474
      %v476 = vpop.f32.mrb[0].mxu0
      %477 = vmatprep.mubr.f32.mxu0 0.0
      %478 = vmatmul.mubr.f32.gmra.mrb[0].mxu0 %v358
      %v479 = vpop.f32.mrb[0].mxu0
      %v480 = vadd.f32 %v348, %v479
      %v481 = vpop.f32.mrb[0].mxu0
      %482 = vmatprep.mubr.f32.mxu0 0.0
      %483 = vmatmul.mubr.f32.gmra.mrb[0].mxu0 %v361
      %v484 = vpop.f32.mrb[0].mxu0
      %v485 = vadd.f32 %v348, %v484
      %v486 = vpop.f32.mrb[0].mxu0
      %487 = vmatprep.mubr.f32.mxu0 0.0
      %488 = vmatmul.mubr.f32.gmra.mrb[0].mxu0 %v364
      %v489 = vpop.f32.mrb[0].mxu0
      %v490 = vadd.f32 %v348, %v489
      %v491 = vpop.f32.mrb[0].mxu0
      %492 = vmatprep.mubr.f32.mxu0 0.0
      %493 = vmatmul.mubr.f32.gmra.mrb[0].mxu0 %v367
      %v494 = vpop.f32.mrb[0].mxu0
      %v495 = vadd.f32 %v348, %v494
      %v496 = vpop.f32.mrb[0].mxu0
      %497 = vmatprep.mubr.f32.mxu0 0.0
      %498 = vmatmul.mubr.f32.gmra.mrb[0].mxu0 %v370
      %v499 = vpop.f32.mrb[0].mxu0
      %v500 = vadd.f32 %v348, %v499
      %v501 = vpop.f32.mrb[0].mxu0
      %502 = vmatprep.mubr.f32.mxu0 0.0
      %503 = vmatmul.mubr.f32.gmra.mrb[0].mxu0 %v373
      %v504 = vpop.f32.mrb[0].mxu0
      %v505 = vadd.f32 %v348, %v504
      %v506 = vpop.f32.mrb[0].mxu0
      %507 = vmatprep.mubr.f32.mxu0 0.0
      %508 = vmatmul.mubr.f32.gmra.mrb[0].mxu0 %v376
      %v509 = vpop.f32.mrb[0].mxu0
      %v510 = vadd.f32 %v348, %v509
      %v511 = vpop.f32.mrb[0].mxu0
      %512 = vmatprep.mubr.f32.mxu0 0.0
      %513 = vmatmul.mubr.f32.gmra.mrb[0].mxu0 %v379
      %v514 = vpop.f32.mrb[0].mxu0
      %v515 = vadd.f32 %v348, %v514
      %v516 = vpop.f32.mrb[0].mxu0
      %517 = vmatprep.mubr.f32.mxu0 0.0
      %518 = vmatmul.mubr.f32.gmra.mrb[0].mxu0 %v382
      %v519 = vpop.f32.mrb[0].mxu0
      %v520 = vadd.f32 %v348, %v519
      %v521 = vpop.f32.mrb[0].mxu0
      %522 = vmatprep.mubr.f32.mxu0 0.0
      %523 = vmatmul.mubr.f32.gmra.mrb[0].mxu0 %v385
      %v524 = vpop.f32.mrb[0].mxu0
      %v525 = vadd.f32 %v348, %v524
      %v526 = vpop.f32.mrb[0].mxu0
      %527 = vmatprep.mubr.f32.mxu0 0.0
      %528 = vmatmul.mubr.f32.gmra.mrb[0].mxu0 %v388
      %v529 = vpop.f32.mrb[0].mxu0
      %v530 = vadd.f32 %v348, %v529
      %v531 = vpop.f32.mrb[0].mxu0
      %532 = vmatprep.mubr.f32.mxu0 0.0
      %533 = vmatmul.mubr.f32.gmra.mrb[0].mxu0 %v391
      %v534 = vpop.f32.mrb[0].mxu0
      %v535 = vadd.f32 %v348, %v534
      %v536 = vpop.f32.mrb[0].mxu0
      %537 = vmatprep.mubr.f32.mxu0 0.0
      %538 = vmatmul.mubr.f32.gmra.mrb[0].mxu0 %v394
      %v539 = vpop.f32.mrb[0].mxu0
      %v540 = vadd.f32 %v348, %v539
      %v541 = vpop.f32.mrb[0].mxu0
      %542 = vmatprep.mubr.f32.mxu0 0.0
      %543 = vmatmul.mubr.f32.gmra.mrb[0].mxu0 %v397
      %v544 = vpop.f32.mrb[0].mxu0
      %v545 = vadd.f32 %v348, %v544
      %v546 = vpop.f32.mrb[0].mxu0
      %547 = vdwg.mxu0
      %v548 = vmax.f32 %v470, 0.0
      %v549 = vmax.f32 %v475, 0.0
      %v550 = vmax.f32 %v480, 0.0
      %v551 = vmax.f32 %v485, 0.0
      %v552 = vmax.f32 %v490, 0.0
      %v553 = vmax.f32 %v495, 0.0
      %v554 = vmax.f32 %v500, 0.0
      %v555 = vmax.f32 %v505, 0.0
      %v556 = vmax.f32 %v510, 0.0
      %v557 = vmax.f32 %v515, 0.0
      %v558 = vmax.f32 %v520, 0.0
      %v559 = vmax.f32 %v525, 0.0
      %v560 = vmax.f32 %v530, 0.0
      %v561 = vmax.f32 %v535, 0.0
      %v562 = vmax.f32 %v540, 0.0
      %v563 = vmax.f32 %v545, 0.0
      %v564 = vld [vmem:[%s315] sm:$0xff]
      %v565 = vld [vmem:[%s315 + $0x8] sm:$0xff]
      %v566 = vld [vmem:[%s315 + $0x10] sm:$0xff]
      %v567 = vld [vmem:[%s315 + $0x18] sm:$0xff]
      %v569 = vsel %vm350, %v564, 0
      %v572 = vsel %vm350, %v565, 0
      %v575 = vsel %vm350, %v566, 0
      %v578 = vsel %vm350, %v567, 0
      %580 = vmatprep.subr.mxu0 0.0
      %581 = vmatpush1.msra.mxu0 %v401
      %582 = vmatprep.subr.mxu0 0.0
      %583 = vmatpush1.msra.mxu0 0.0
      %584 = vmatprep.subr.mxu0 0.0
      %585 = vmatpush1.msra.mxu0 0.0
      %586 = vmatprep.subr.mxu0 0.0
      %587 = vmatpush1.msra.mxu0 0.0
      %588 = vmatprep.subr.mxu0 0.0
      %589 = vmatpush1.msra.mxu0 0.0
      %590 = vmatprep.subr.mxu0 0.0
      %591 = vmatpush1.msra.mxu0 0.0
      %592 = vmatprep.subr.mxu0 0.0
      %593 = vmatpush1.msra.mxu0 0.0
      %594 = vmatprep.subr.mxu0 0.0
      %595 = vmatpush1.msra.mxu0 0.0
      %596 = vmatprep.subr.mxu0 0.0
      %597 = vmatpush1.msra.mxu0 0.0
      %598 = vmatprep.subr.mxu0 0.0
      %599 = vmatpush1.msra.mxu0 0.0
      %600 = vmatprep.subr.mxu0 0.0
      %601 = vmatpush1.msra.mxu0 0.0
      %602 = vmatprep.subr.mxu0 0.0
      %603 = vmatpush1.msra.mxu0 0.0
      %604 = vmatprep.subr.mxu0 0.0
      %605 = vmatpush1.msra.mxu0 0.0
      %606 = vmatprep.subr.mxu0 0.0
      %607 = vmatpush1.msra.mxu0 0.0
      %608 = vmatprep.subr.mxu0 0.0
      %609 = vmatpush1.msra.mxu0 0.0
      %610 = vmatprep.subr.mxu0 0.0
      %611 = vmatpush1.msra.mxu0 0.0
      %612 = vmatprep.subr.mxu0 0.0
      %613 = vmatpush1.msra.mxu0 0.0
      %614 = vmatprep.subr.mxu0 0.0
      %615 = vmatpush1.msra.mxu0 0.0
      %616 = vmatprep.subr.mxu0 0.0
      %617 = vmatpush1.msra.mxu0 0.0
      %618 = vmatprep.subr.mxu0 0.0
      %619 = vmatpush1.msra.mxu0 0.0
      %620 = vmatprep.subr.mxu0 0.0
      %621 = vmatpush1.msra.mxu0 0.0
      %622 = vmatprep.subr.mxu0 0.0
      %623 = vmatpush1.msra.mxu0 0.0
      %624 = vmatprep.subr.mxu0 0.0
      %625 = vmatpush1.msra.mxu0 0.0
      %626 = vmatprep.subr.mxu0 0.0
      %627 = vmatpush1.msra.mxu0 0.0
      %628 = vmatprep.subr.mxu0 0.0
      %629 = vmatpush1.msra.mxu0 0.0
      %630 = vmatprep.subr.mxu0 0.0
      %631 = vmatpush1.msra.mxu0 0.0
      %632 = vmatprep.subr.mxu0 0.0
      %633 = vmatpush1.msra.mxu0 0.0
      %634 = vmatprep.subr.mxu0 0.0
      %635 = vmatpush1.msra.mxu0 0.0
      %636 = vmatprep.subr.mxu0 0.0
      %637 = vmatpush1.msra.mxu0 0.0
      %638 = vmatprep.subr.mxu0 0.0
      %639 = vmatpush1.msra.mxu0 0.0
      %640 = vmatprep.subr.mxu0 0.0
      %641 = vmatpush1.msra.mxu0 0.0
      %642 = vmatprep.subr.mxu0 0.0
      %643 = vmatpush1.msra.mxu0 0.0
      %644 = vmatprep.mubr.f32.mxu0 0.0
      %645 = vmatmul.mubr.f32.gmra.mrb[0].mxu0 %v569
      %v646 = vpop.f32.mrb[0].mxu0
      %v647 = vadd.f32 %v348, %v646
      %v648 = vpop.f32.mrb[0].mxu0
      %649 = vmatprep.mubr.f32.mxu0 0.0
      %650 = vmatmul.mubr.f32.gmra.mrb[0].mxu0 %v572
      %v651 = vpop.f32.mrb[0].mxu0
      %v652 = vadd.f32 %v348, %v651
      %v653 = vpop.f32.mrb[0].mxu0
      %654 = vmatprep.mubr.f32.mxu0 0.0
      %655 = vmatmul.mubr.f32.gmra.mrb[0].mxu0 %v575
      %v656 = vpop.f32.mrb[0].mxu0
      %v657 = vadd.f32 %v348, %v656
      %v658 = vpop.f32.mrb[0].mxu0
      %659 = vmatprep.mubr.f32.mxu0 0.0
      %660 = vmatmul.mubr.f32.gmra.mrb[0].mxu0 %v578
      %v661 = vpop.f32.mrb[0].mxu0
      %v662 = vadd.f32 %v348, %v661
      %v663 = vpop.f32.mrb[0].mxu0
      %664 = vdwg.mxu0
      %v665 = vmax.f32 %v647, 0.0
      %v666 = vmax.f32 %v652, 0.0
      %v667 = vmax.f32 %v657, 0.0
      %v668 = vmax.f32 %v662, 0.0
      %v669 = vld [vmem:[%s4] sm:$0xff]
      %vm670 = vcmask 64512
      %v672 = vsel %vm670, %v665, 0
      %v675 = vsel %vm670, %v666, 0
      %v678 = vsel %vm670, %v548, 0
      %v681 = vsel %vm670, %v549, 0
      %v684 = vsel %vm670, %v550, 0
      %v687 = vsel %vm670, %v551, 0
      %v690 = vsel %vm670, %v552, 0
      %v693 = vsel %vm670, %v553, 0
      %v696 = vsel %vm670, %v554, 0
      %v699 = vsel %vm670, %v555, 0
      %v702 = vsel %vm670, %v556, 0
      %v705 = vsel %vm670, %v557, 0
      %v708 = vsel %vm670, %v558, 0
      %v711 = vsel %vm670, %v559, 0
      %v714 = vsel %vm670, %v560, 0
      %v717 = vsel %vm670, %v561, 0
      %v720 = vsel %vm670, %v562, 0
      %v723 = vsel %vm670, %v563, 0
      %v726 = vsel %vm670, %v667, 0
      %v729 = vsel %vm670, %v668, 0
      %731 = vmatprep.subr.mxu0 0.0
      %732 = vmatpush1.msra.mxu0 %v669
      %733 = vmatprep.subr.mxu0 0.0
      %734 = vmatpush1.msra.mxu0 0.0
      %735 = vmatprep.subr.mxu0 0.0
      %736 = vmatpush1.msra.mxu0 0.0
      %737 = vmatprep.subr.mxu0 0.0
      %738 = vmatpush1.msra.mxu0 0.0
      %739 = vmatprep.subr.mxu0 0.0
      %740 = vmatpush1.msra.mxu0 0.0
      %741 = vmatprep.subr.mxu0 0.0
      %742 = vmatpush1.msra.mxu0 0.0
      %743 = vmatprep.subr.mxu0 0.0
      %744 = vmatpush1.msra.mxu0 0.0
      %745 = vmatprep.subr.mxu0 0.0
      %746 = vmatpush1.msra.mxu0 0.0
      %747 = vmatprep.subr.mxu0 0.0
      %748 = vmatpush1.msra.mxu0 0.0
      %749 = vmatprep.subr.mxu0 0.0
      %750 = vmatpush1.msra.mxu0 0.0
      %751 = vmatprep.subr.mxu0 0.0
      %752 = vmatpush1.msra.mxu0 0.0
      %753 = vmatprep.subr.mxu0 0.0
      %754 = vmatpush1.msra.mxu0 0.0
      %755 = vmatprep.subr.mxu0 0.0
      %756 = vmatpush1.msra.mxu0 0.0
      %757 = vmatprep.subr.mxu0 0.0
      %758 = vmatpush1.msra.mxu0 0.0
      %759 = vmatprep.subr.mxu0 0.0
      %760 = vmatpush1.msra.mxu0 0.0
      %761 = vmatprep.subr.mxu0 0.0
      %762 = vmatpush1.msra.mxu0 0.0
      %763 = vmatprep.subr.mxu0 0.0
      %764 = vmatpush1.msra.mxu0 0.0
      %765 = vmatprep.subr.mxu0 0.0
      %766 = vmatpush1.msra.mxu0 0.0
      %767 = vmatprep.subr.mxu0 0.0
      %768 = vmatpush1.msra.mxu0 0.0
      %769 = vmatprep.subr.mxu0 0.0
      %770 = vmatpush1.msra.mxu0 0.0
      %771 = vmatprep.subr.mxu0 0.0
      %772 = vmatpush1.msra.mxu0 0.0
      %773 = vmatprep.subr.mxu0 0.0
      %774 = vmatpush1.msra.mxu0 0.0
      %775 = vmatprep.subr.mxu0 0.0
      %776 = vmatpush1.msra.mxu0 0.0
      %777 = vmatprep.subr.mxu0 0.0
      %778 = vmatpush1.msra.mxu0 0.0
      %779 = vmatprep.subr.mxu0 0.0
      %780 = vmatpush1.msra.mxu0 0.0
      %781 = vmatprep.subr.mxu0 0.0
      %782 = vmatpush1.msra.mxu0 0.0
      %783 = vmatprep.subr.mxu0 0.0
      %784 = vmatpush1.msra.mxu0 0.0
      %785 = vmatprep.subr.mxu0 0.0
      %786 = vmatpush1.msra.mxu0 0.0
      %787 = vmatprep.subr.mxu0 0.0
      %788 = vmatpush1.msra.mxu0 0.0
      %789 = vmatprep.subr.mxu0 0.0
      %790 = vmatpush1.msra.mxu0 0.0
      %791 = vmatprep.subr.mxu0 0.0
      %792 = vmatpush1.msra.mxu0 0.0
      %793 = vmatprep.subr.mxu0 0.0
      %794 = vmatpush1.msra.mxu0 0.0
      %795 = vmatprep.mubr.f32.mxu0 0.0
      %796 = vmatmul.mubr.f32.gmra.mrb[0].mxu0 %v672
      %v797 = vpop.f32.mrb[0].mxu0
      %v798 = vadd.f32 0.0, %v797
      %v799 = vpop.f32.mrb[0].mxu0
      %800 = vmatprep.mubr.f32.mxu0 0.0
      %801 = vmatmul.mubr.f32.gmra.mrb[0].mxu0 %v675
      %v802 = vpop.f32.mrb[0].mxu0
      %v803 = vadd.f32 0.0, %v802
      %v804 = vpop.f32.mrb[0].mxu0
      %805 = vmatprep.mubr.f32.mxu0 0.0
      %806 = vmatmul.mubr.f32.gmra.mrb[0].mxu0 %v678
      %v807 = vpop.f32.mrb[0].mxu0
      %v808 = vadd.f32 0.0, %v807
      %v809 = vpop.f32.mrb[0].mxu0
      %810 = vmatprep.mubr.f32.mxu0 0.0
      %811 = vmatmul.mubr.f32.gmra.mrb[0].mxu0 %v681
      %v812 = vpop.f32.mrb[0].mxu0
      %v813 = vadd.f32 0.0, %v812
      %v814 = vpop.f32.mrb[0].mxu0
      %815 = vmatprep.mubr.f32.mxu0 0.0
      %816 = vmatmul.mubr.f32.gmra.mrb[0].mxu0 %v684
      %v817 = vpop.f32.mrb[0].mxu0
      %v818 = vadd.f32 0.0, %v817
      %v819 = vpop.f32.mrb[0].mxu0
      %820 = vmatprep.mubr.f32.mxu0 0.0
      %821 = vmatmul.mubr.f32.gmra.mrb[0].mxu0 %v687
      %v822 = vpop.f32.mrb[0].mxu0
      %v823 = vadd.f32 0.0, %v822
      %v824 = vpop.f32.mrb[0].mxu0
      %825 = vmatprep.mubr.f32.mxu0 0.0
      %826 = vmatmul.mubr.f32.gmra.mrb[0].mxu0 %v690
      %v827 = vpop.f32.mrb[0].mxu0
      %v828 = vadd.f32 0.0, %v827
      %v829 = vpop.f32.mrb[0].mxu0
      %830 = vmatprep.mubr.f32.mxu0 0.0
      %831 = vmatmul.mubr.f32.gmra.mrb[0].mxu0 %v693
      %v832 = vpop.f32.mrb[0].mxu0
      %v833 = vadd.f32 0.0, %v832
      %v834 = vpop.f32.mrb[0].mxu0
      %835 = vmatprep.mubr.f32.mxu0 0.0
      %836 = vmatmul.mubr.f32.gmra.mrb[0].mxu0 %v696
      %v837 = vpop.f32.mrb[0].mxu0
      %v838 = vadd.f32 0.0, %v837
      %v839 = vpop.f32.mrb[0].mxu0
      %840 = vmatprep.mubr.f32.mxu0 0.0
      %841 = vmatmul.mubr.f32.gmra.mrb[0].mxu0 %v699
      %v842 = vpop.f32.mrb[0].mxu0
      %v843 = vadd.f32 0.0, %v842
      %v844 = vpop.f32.mrb[0].mxu0
      %845 = vmatprep.mubr.f32.mxu0 0.0
      %846 = vmatmul.mubr.f32.gmra.mrb[0].mxu0 %v702
      %v847 = vpop.f32.mrb[0].mxu0
      %v848 = vadd.f32 0.0, %v847
      %v849 = vpop.f32.mrb[0].mxu0
      %850 = vmatprep.mubr.f32.mxu0 0.0
      %851 = vmatmul.mubr.f32.gmra.mrb[0].mxu0 %v705
      %v852 = vpop.f32.mrb[0].mxu0
      %v853 = vadd.f32 0.0, %v852
      %v854 = vpop.f32.mrb[0].mxu0
      %855 = vmatprep.mubr.f32.mxu0 0.0
      %856 = vmatmul.mubr.f32.gmra.mrb[0].mxu0 %v708
      %v857 = vpop.f32.mrb[0].mxu0
      %v858 = vadd.f32 0.0, %v857
      %v859 = vpop.f32.mrb[0].mxu0
      %860 = vmatprep.mubr.f32.mxu0 0.0
      %861 = vmatmul.mubr.f32.gmra.mrb[0].mxu0 %v711
      %v862 = vpop.f32.mrb[0].mxu0
      %v863 = vadd.f32 0.0, %v862
      %v864 = vpop.f32.mrb[0].mxu0
      %865 = vmatprep.mubr.f32.mxu0 0.0
      %866 = vmatmul.mubr.f32.gmra.mrb[0].mxu0 %v714
      %v867 = vpop.f32.mrb[0].mxu0
      %v868 = vadd.f32 0.0, %v867
      %v869 = vpop.f32.mrb[0].mxu0
      %870 = vmatprep.mubr.f32.mxu0 0.0
      %871 = vmatmul.mubr.f32.gmra.mrb[0].mxu0 %v717
      %v872 = vpop.f32.mrb[0].mxu0
      %v873 = vadd.f32 0.0, %v872
      %v874 = vpop.f32.mrb[0].mxu0
      %875 = vmatprep.mubr.f32.mxu0 0.0
      %876 = vmatmul.mubr.f32.gmra.mrb[0].mxu0 %v720
      %v877 = vpop.f32.mrb[0].mxu0
      %v878 = vadd.f32 0.0, %v877
      %v879 = vpop.f32.mrb[0].mxu0
      %880 = vmatprep.mubr.f32.mxu0 0.0
      %881 = vmatmul.mubr.f32.gmra.mrb[0].mxu0 %v723
      %v882 = vpop.f32.mrb[0].mxu0
      %v883 = vadd.f32 0.0, %v882
      %v884 = vpop.f32.mrb[0].mxu0
      %885 = vmatprep.mubr.f32.mxu0 0.0
      %886 = vmatmul.mubr.f32.gmra.mrb[0].mxu0 %v726
      %v887 = vpop.f32.mrb[0].mxu0
      %v888 = vadd.f32 0.0, %v887
      %v889 = vpop.f32.mrb[0].mxu0
      %890 = vmatprep.mubr.f32.mxu0 0.0
      %891 = vmatmul.mubr.f32.gmra.mrb[0].mxu0 %v729
      %v892 = vpop.f32.mrb[0].mxu0
      %v893 = vadd.f32 0.0, %v892
      %v894 = vpop.f32.mrb[0].mxu0
      %895 = vdwg.mxu0
      %vm916 = vcmask 1040384
      %v917 = vrot.slane %v798, 7
      %v918 = vrot.slane %v803, 7
      %v919 = vsel %vm916, %v917, %v918
      %v920 = vrot.slane %v808, 7
      %v921 = vrot.slane %v813, 7
      %v922 = vsel %vm916, %v920, %v921
      %v923 = vrot.slane %v818, 7
      %v924 = vrot.slane %v823, 7
      %v925 = vsel %vm916, %v923, %v924
      %v926 = vrot.slane %v828, 7
      %v927 = vrot.slane %v833, 7
      %v928 = vsel %vm916, %v926, %v927
      %v929 = vrot.slane %v838, 7
      %v930 = vrot.slane %v843, 7
      %v931 = vsel %vm916, %v929, %v930
      %v932 = vrot.slane %v848, 7
      %v933 = vrot.slane %v853, 7
      %v934 = vsel %vm916, %v932, %v933
      %v935 = vrot.slane %v858, 7
      %v936 = vrot.slane %v863, 7
      %v937 = vsel %vm916, %v935, %v936
      %v938 = vrot.slane %v868, 7
      %v939 = vrot.slane %v873, 7
      %v940 = vsel %vm916, %v938, %v939
      %v941 = vrot.slane %v878, 7
      %v942 = vrot.slane %v883, 7
      %v943 = vsel %vm916, %v941, %v942
      %v944 = vrot.slane %v888, 7
      %v945 = vrot.slane %v893, 7
      %v946 = vsel %vm916, %v944, %v945
      %v967 = vsel %vm916, 0.0, %v917
      %v968 = vsel %vm916, 0.0, %v920
      %v969 = vsel %vm916, 0.0, %v923
      %v970 = vsel %vm916, 0.0, %v926
      %v971 = vsel %vm916, 0.0, %v929
      %v972 = vsel %vm916, 0.0, %v932
      %v973 = vsel %vm916, 0.0, %v935
      %v974 = vsel %vm916, 0.0, %v938
      %v975 = vsel %vm916, 0.0, %v941
      %v976 = vsel %vm916, 0.0, %v944
      %vm977 = vcmask 1046528
      %v978 = vrot.slane %v798, 1
      %v979 = vrot.slane %v803, 1
      %v980 = vsel %vm977, %v978, %v979
      %v981 = vrot.slane %v808, 1
      %v982 = vrot.slane %v813, 1
      %v983 = vsel %vm977, %v981, %v982
      %v984 = vrot.slane %v818, 1
      %v985 = vrot.slane %v823, 1
      %v986 = vsel %vm977, %v984, %v985
      %v987 = vrot.slane %v828, 1
      %v988 = vrot.slane %v833, 1
      %v989 = vsel %vm977, %v987, %v988
      %v990 = vrot.slane %v838, 1
      %v991 = vrot.slane %v843, 1
      %v992 = vsel %vm977, %v990, %v991
      %v993 = vrot.slane %v848, 1
      %v994 = vrot.slane %v853, 1
      %v995 = vsel %vm977, %v993, %v994
      %v996 = vrot.slane %v858, 1
      %v997 = vrot.slane %v863, 1
      %v998 = vsel %vm977, %v996, %v997
      %v999 = vrot.slane %v868, 1
      %v1000 = vrot.slane %v873, 1
      %v1001 = vsel %vm977, %v999, %v1000
      %v1002 = vrot.slane %v878, 1
      %v1003 = vrot.slane %v883, 1
      %v1004 = vsel %vm977, %v1002, %v1003
      %v1005 = vrot.slane %v888, 1
      %v1006 = vrot.slane %v893, 1
      %v1007 = vsel %vm977, %v1005, %v1006
      %v1018 = vsel %vm977, %v979, 0.0
      %v1019 = vsel %vm977, %v982, 0.0
      %v1020 = vsel %vm977, %v985, 0.0
      %v1021 = vsel %vm977, %v988, 0.0
      %v1022 = vsel %vm977, %v991, 0.0
      %v1023 = vsel %vm977, %v994, 0.0
      %v1024 = vsel %vm977, %v997, 0.0
      %v1025 = vsel %vm977, %v1000, 0.0
      %v1026 = vsel %vm977, %v1003, 0.0
      %v1027 = vsel %vm977, %v1006, 0.0
      %v1028 = vld [vmem:[%s5] sm:$0x1]
      %1029 = vrot.lane.b32.xlu0 %v798, 120
      %v1030 = vpop.permute.xlu0 %1029
      %1031 = vrot.lane.b32.xlu0 %v803, 120
      %v1032 = vpop.permute.xlu0 %1031
      %1033 = vrot.lane.b32.xlu0 %v808, 120
      %v1034 = vpop.permute.xlu0 %1033
      %1035 = vrot.lane.b32.xlu0 %v813, 120
      %v1036 = vpop.permute.xlu0 %1035
      %1037 = vrot.lane.b32.xlu0 %v818, 120
      %v1038 = vpop.permute.xlu0 %1037
      %1039 = vrot.lane.b32.xlu0 %v823, 120
      %v1040 = vpop.permute.xlu0 %1039
      %1041 = vrot.lane.b32.xlu0 %v828, 120
      %v1042 = vpop.permute.xlu0 %1041
      %1043 = vrot.lane.b32.xlu0 %v833, 120
      %v1044 = vpop.permute.xlu0 %1043
      %1045 = vrot.lane.b32.xlu0 %v838, 120
      %v1046 = vpop.permute.xlu0 %1045
      %1047 = vrot.lane.b32.xlu0 %v843, 120
      %v1048 = vpop.permute.xlu0 %1047
      %1049 = vrot.lane.b32.xlu0 %v848, 120
      %v1050 = vpop.permute.xlu0 %1049
      %1051 = vrot.lane.b32.xlu0 %v853, 120
      %v1052 = vpop.permute.xlu0 %1051
      %1053 = vrot.lane.b32.xlu0 %v858, 120
      %v1054 = vpop.permute.xlu0 %1053
      %1055 = vrot.lane.b32.xlu0 %v863, 120
      %v1056 = vpop.permute.xlu0 %1055
      %1057 = vrot.lane.b32.xlu0 %v868, 120
      %v1058 = vpop.permute.xlu0 %1057
      %1059 = vrot.lane.b32.xlu0 %v873, 120
      %v1060 = vpop.permute.xlu0 %1059
      %1061 = vrot.lane.b32.xlu0 %v878, 120
      %v1062 = vpop.permute.xlu0 %1061
      %1063 = vrot.lane.b32.xlu0 %v883, 120
      %v1064 = vpop.permute.xlu0 %1063
      %1065 = vrot.lane.b32.xlu0 %v888, 120
      %v1066 = vpop.permute.xlu0 %1065
      %1067 = vrot.lane.b32.xlu0 %v893, 120
      %v1068 = vpop.permute.xlu0 %1067
      %v1089 = vadd.f32 %v967, %v1030
      %v1090 = vadd.f32 %v919, %v1032
      %v1091 = vadd.f32 %v968, %v1034
      %v1092 = vadd.f32 %v922, %v1036
      %v1093 = vadd.f32 %v969, %v1038
      %v1094 = vadd.f32 %v925, %v1040
      %v1095 = vadd.f32 %v970, %v1042
      %v1096 = vadd.f32 %v928, %v1044
      %v1097 = vadd.f32 %v971, %v1046
      %v1098 = vadd.f32 %v931, %v1048
      %v1099 = vadd.f32 %v972, %v1050
      %v1100 = vadd.f32 %v934, %v1052
      %v1101 = vadd.f32 %v973, %v1054
      %v1102 = vadd.f32 %v937, %v1056
      %v1103 = vadd.f32 %v974, %v1058
      %v1104 = vadd.f32 %v940, %v1060
      %v1105 = vadd.f32 %v975, %v1062
      %v1106 = vadd.f32 %v943, %v1064
      %v1107 = vadd.f32 %v976, %v1066
      %v1108 = vadd.f32 %v946, %v1068
      %v1110 = vlaneseq
      %v1111 = vshrl.u32 %v1110, 7
      %v1112 = vsub.s32 0, %v1111
      %v1113 = vrot.slane %v1028, %v1112
      %v1115 = vadd.f32 %v1089, %v1113
      %v1116 = vadd.f32 %v1090, %v1113
      %v1117 = vadd.f32 %v1091, %v1113
      %v1118 = vadd.f32 %v1092, %v1113
      %v1119 = vadd.f32 %v1093, %v1113
      %v1120 = vadd.f32 %v1094, %v1113
      %v1121 = vadd.f32 %v1095, %v1113
      %v1122 = vadd.f32 %v1096, %v1113
      %v1123 = vadd.f32 %v1097, %v1113
      %v1124 = vadd.f32 %v1098, %v1113
      %v1125 = vadd.f32 %v1099, %v1113
      %v1126 = vadd.f32 %v1100, %v1113
      %v1127 = vadd.f32 %v1101, %v1113
      %v1128 = vadd.f32 %v1102, %v1113
      %v1129 = vadd.f32 %v1103, %v1113
      %v1130 = vadd.f32 %v1104, %v1113
      %v1131 = vadd.f32 %v1105, %v1113
      %v1132 = vadd.f32 %v1106, %v1113
      %v1133 = vadd.f32 %v1107, %v1113
      %v1134 = vadd.f32 %v1108, %v1113
      %v1135 = vmax.f32 %v1115, 0.0
      %v1136 = vmax.f32 %v1116, 0.0
      %v1137 = vmax.f32 %v1117, 0.0
      %v1138 = vmax.f32 %v1118, 0.0
      %v1139 = vmax.f32 %v1119, 0.0
      %v1140 = vmax.f32 %v1120, 0.0
      %v1141 = vmax.f32 %v1121, 0.0
      %v1142 = vmax.f32 %v1122, 0.0
      %v1143 = vmax.f32 %v1123, 0.0
      %v1144 = vmax.f32 %v1124, 0.0
      %v1145 = vmax.f32 %v1125, 0.0
      %v1146 = vmax.f32 %v1126, 0.0
      %v1147 = vmax.f32 %v1127, 0.0
      %v1148 = vmax.f32 %v1128, 0.0
      %v1149 = vmax.f32 %v1129, 0.0
      %v1150 = vmax.f32 %v1130, 0.0
      %v1151 = vmax.f32 %v1131, 0.0
      %v1152 = vmax.f32 %v1132, 0.0
      %v1153 = vmax.f32 %v1133, 0.0
      %v1154 = vmax.f32 %v1134, 0.0
      %1165 = vrot.lane.b32.xlu0 %v980, 120
      %v1166 = vpop.permute.xlu0 %1165
      %1167 = vrot.lane.b32.xlu0 %v1018, 120
      %v1168 = vpop.permute.xlu0 %1167
      %1169 = vrot.lane.b32.xlu0 %v983, 120
      %v1170 = vpop.permute.xlu0 %1169
      %1171 = vrot.lane.b32.xlu0 %v1019, 120
      %v1172 = vpop.permute.xlu0 %1171
      %1173 = vrot.lane.b32.xlu0 %v986, 120
      %v1174 = vpop.permute.xlu0 %1173
      %1175 = vrot.lane.b32.xlu0 %v1020, 120
      %v1176 = vpop.permute.xlu0 %1175
      %1177 = vrot.lane.b32.xlu0 %v989, 120
      %v1178 = vpop.permute.xlu0 %1177
      %1179 = vrot.lane.b32.xlu0 %v1021, 120
      %v1180 = vpop.permute.xlu0 %1179
      %1181 = vrot.lane.b32.xlu0 %v992, 120
      %v1182 = vpop.permute.xlu0 %1181
      %1183 = vrot.lane.b32.xlu0 %v1022, 120
      %v1184 = vpop.permute.xlu0 %1183
      %1185 = vrot.lane.b32.xlu0 %v995, 120
      %v1186 = vpop.permute.xlu0 %1185
      %1187 = vrot.lane.b32.xlu0 %v1023, 120
      %v1188 = vpop.permute.xlu0 %1187
      %1189 = vrot.lane.b32.xlu0 %v998, 120
      %v1190 = vpop.permute.xlu0 %1189
      %1191 = vrot.lane.b32.xlu0 %v1024, 120
      %v1192 = vpop.permute.xlu0 %1191
      %1193 = vrot.lane.b32.xlu0 %v1001, 120
      %v1194 = vpop.permute.xlu0 %1193
      %1195 = vrot.lane.b32.xlu0 %v1025, 120
      %v1196 = vpop.permute.xlu0 %1195
      %1197 = vrot.lane.b32.xlu0 %v1004, 120
      %v1198 = vpop.permute.xlu0 %1197
      %1199 = vrot.lane.b32.xlu0 %v1026, 120
      %v1200 = vpop.permute.xlu0 %1199
      %1201 = vrot.lane.b32.xlu0 %v1007, 120
      %v1202 = vpop.permute.xlu0 %1201
      %1203 = vrot.lane.b32.xlu0 %v1027, 120
      %v1204 = vpop.permute.xlu0 %1203
      %v1225 = vadd.f32 %v798, %v1166
      %v1226 = vadd.f32 %v803, %v1168
      %v1227 = vadd.f32 %v808, %v1170
      %v1228 = vadd.f32 %v813, %v1172
      %v1229 = vadd.f32 %v818, %v1174
      %v1230 = vadd.f32 %v823, %v1176
      %v1231 = vadd.f32 %v828, %v1178
      %v1232 = vadd.f32 %v833, %v1180
      %v1233 = vadd.f32 %v838, %v1182
      %v1234 = vadd.f32 %v843, %v1184
      %v1235 = vadd.f32 %v848, %v1186
      %v1236 = vadd.f32 %v853, %v1188
      %v1237 = vadd.f32 %v858, %v1190
      %v1238 = vadd.f32 %v863, %v1192
      %v1239 = vadd.f32 %v868, %v1194
      %v1240 = vadd.f32 %v873, %v1196
      %v1241 = vadd.f32 %v878, %v1198
      %v1242 = vadd.f32 %v883, %v1200
      %v1243 = vadd.f32 %v888, %v1202
      %v1244 = vadd.f32 %v893, %v1204
      %1245 = vrot.lane.b32.xlu0 %v1113, 16
      %v1246 = vpop.permute.xlu0 %1245
      %v1248 = vadd.f32 %v1225, %v1246
      %v1249 = vadd.f32 %v1226, %v1246
      %v1250 = vadd.f32 %v1227, %v1246
      %v1251 = vadd.f32 %v1228, %v1246
      %v1252 = vadd.f32 %v1229, %v1246
      %v1253 = vadd.f32 %v1230, %v1246
      %v1254 = vadd.f32 %v1231, %v1246
      %v1255 = vadd.f32 %v1232, %v1246
      %v1256 = vadd.f32 %v1233, %v1246
      %v1257 = vadd.f32 %v1234, %v1246
      %v1258 = vadd.f32 %v1235, %v1246
      %v1259 = vadd.f32 %v1236, %v1246
      %v1260 = vadd.f32 %v1237, %v1246
      %v1261 = vadd.f32 %v1238, %v1246
      %v1262 = vadd.f32 %v1239, %v1246
      %v1263 = vadd.f32 %v1240, %v1246
      %v1264 = vadd.f32 %v1241, %v1246
      %v1265 = vadd.f32 %v1242, %v1246
      %v1266 = vadd.f32 %v1243, %v1246
      %v1267 = vadd.f32 %v1244, %v1246
      %v1268 = vmax.f32 %v1248, 0.0
      %v1269 = vmax.f32 %v1249, 0.0
      %v1270 = vmax.f32 %v1250, 0.0
      %v1271 = vmax.f32 %v1251, 0.0
      %v1272 = vmax.f32 %v1252, 0.0
      %v1273 = vmax.f32 %v1253, 0.0
      %v1274 = vmax.f32 %v1254, 0.0
      %v1275 = vmax.f32 %v1255, 0.0
      %v1276 = vmax.f32 %v1256, 0.0
      %v1277 = vmax.f32 %v1257, 0.0
      %v1278 = vmax.f32 %v1258, 0.0
      %v1279 = vmax.f32 %v1259, 0.0
      %v1280 = vmax.f32 %v1260, 0.0
      %v1281 = vmax.f32 %v1261, 0.0
      %v1282 = vmax.f32 %v1262, 0.0
      %v1283 = vmax.f32 %v1263, 0.0
      %v1284 = vmax.f32 %v1264, 0.0
      %v1285 = vmax.f32 %v1265, 0.0
      %v1286 = vmax.f32 %v1266, 0.0
      %v1287 = vmax.f32 %v1267, 0.0
      %p1288 = scmp.lt.s32.totalorder %s19, 0
      %s1289 = ssub.s32 0, %s19
      %s1290 = scalar_select %p1288, %s1289, %s19
      %s1291 = sand.u32 %s1290, 1
      %s1292 = ssub.s32 0, %s1291
      %s1293 = scalar_select %p1288, %s1292, %s1291
      %p1294 = scmp.ne.s32.totalorder %s1293, 0
      %p1295 = scmp.lt.s32.totalorder %s1293, 0
      %p1296 = pnand %p1295, %p1294
      %p1297 = pneg %p1296
      %s1298 = sadd.s32 %s1293, 2
      %s1299 = scalar_select %p1297, %s1298, %s1293
      %p1300 = scmp.eq.s32.totalorder %s1299, 0
      %s1301 = scalar_select %p1300, 1, 0
      %p1302 = scmp.eq.s32.totalorder %s1299, 1
      %s1303 = scalar_select %p1302, 9, 10
      %v1304 = vstv %s1301
      %vm1305 = vcmp.le.s32.totalorder %v1304, 0
      %vm1306 = vcmp.le.s32.totalorder %v1304, 1
      %vm1307 = vcmp.le.s32.totalorder %v1304, 2
      %vm1308 = vcmp.le.s32.totalorder %v1304, 3
      %vm1309 = vcmp.le.s32.totalorder %v1304, 4
      %vm1310 = vcmp.le.s32.totalorder %v1304, 5
      %vm1311 = vcmp.le.s32.totalorder %v1304, 6
      %vm1312 = vcmp.le.s32.totalorder %v1304, 7
      %vm1313 = vcmp.le.s32.totalorder %v1304, 8
      %vm1314 = vcmp.le.s32.totalorder %v1304, 9
      %v1315 = vstv %s1303
      %vm1316 = vcmp.gt.s32.totalorder %v1315, 0
      %vm1317 = vcmp.gt.s32.totalorder %v1315, 1
      %vm1318 = vcmp.gt.s32.totalorder %v1315, 2
      %vm1319 = vcmp.gt.s32.totalorder %v1315, 3
      %vm1320 = vcmp.gt.s32.totalorder %v1315, 4
      %vm1321 = vcmp.gt.s32.totalorder %v1315, 5
      %vm1322 = vcmp.gt.s32.totalorder %v1315, 6
      %vm1323 = vcmp.gt.s32.totalorder %v1315, 7
      %vm1324 = vcmp.gt.s32.totalorder %v1315, 8
      %vm1325 = vcmp.gt.s32.totalorder %v1315, 9
      %vm1326 = vmand %vm1305, %vm1316
      %vm1327 = vmand %vm1306, %vm1317
      %vm1328 = vmand %vm1307, %vm1318
      %vm1329 = vmand %vm1308, %vm1319
      %vm1330 = vmand %vm1309, %vm1320
      %vm1331 = vmand %vm1310, %vm1321
      %vm1332 = vmand %vm1311, %vm1322
      %vm1333 = vmand %vm1312, %vm1323
      %vm1334 = vmand %vm1313, %vm1324
      %vm1335 = vmand %vm1314, %vm1325
      %v1336 = vsel %vm1326, 1, 0
      %v1337 = vsel %vm1327, 1, 0
      %v1338 = vsel %vm1328, 1, 0
      %v1339 = vsel %vm1329, 1, 0
      %v1340 = vsel %vm1330, 1, 0
      %v1341 = vsel %vm1331, 1, 0
      %v1342 = vsel %vm1332, 1, 0
      %v1343 = vsel %vm1333, 1, 0
      %v1344 = vsel %vm1334, 1, 0
      %v1345 = vsel %vm1335, 1, 0
      %v1346 = vcvt.s32.f32 %v1336
      %v1347 = vcvt.s32.f32 %v1337
      %v1348 = vcvt.s32.f32 %v1338
      %v1349 = vcvt.s32.f32 %v1339
      %v1350 = vcvt.s32.f32 %v1340
      %v1351 = vcvt.s32.f32 %v1341
      %v1352 = vcvt.s32.f32 %v1342
      %v1353 = vcvt.s32.f32 %v1343
      %v1354 = vcvt.s32.f32 %v1344
      %v1355 = vcvt.s32.f32 %v1345
      %v1356 = vmul.f32 %v1135, %v1346
      %v1357 = vmul.f32 %v1136, %v1346
      %v1358 = vmul.f32 %v1137, %v1347
      %v1359 = vmul.f32 %v1138, %v1347
      %v1360 = vmul.f32 %v1139, %v1348
      %v1361 = vmul.f32 %v1140, %v1348
      %v1362 = vmul.f32 %v1141, %v1349
      %v1363 = vmul.f32 %v1142, %v1349
      %v1364 = vmul.f32 %v1143, %v1350
      %v1365 = vmul.f32 %v1144, %v1350
      %v1366 = vmul.f32 %v1145, %v1351
      %v1367 = vmul.f32 %v1146, %v1351
      %v1368 = vmul.f32 %v1147, %v1352
      %v1369 = vmul.f32 %v1148, %v1352
      %v1370 = vmul.f32 %v1149, %v1353
      %v1371 = vmul.f32 %v1150, %v1353
      %v1372 = vmul.f32 %v1151, %v1354
      %v1373 = vmul.f32 %v1152, %v1354
      %v1374 = vmul.f32 %v1153, %v1355
      %v1375 = vmul.f32 %v1154, %v1355
      %v1376 = vmul.f32 %v1268, %v1346
      %v1377 = vmul.f32 %v1269, %v1346
      %v1378 = vmul.f32 %v1270, %v1347
      %v1379 = vmul.f32 %v1271, %v1347
      %v1380 = vmul.f32 %v1272, %v1348
      %v1381 = vmul.f32 %v1273, %v1348
      %v1382 = vmul.f32 %v1274, %v1349
      %v1383 = vmul.f32 %v1275, %v1349
      %v1384 = vmul.f32 %v1276, %v1350
      %v1385 = vmul.f32 %v1277, %v1350
      %v1386 = vmul.f32 %v1278, %v1351
      %v1387 = vmul.f32 %v1279, %v1351
      %v1388 = vmul.f32 %v1280, %v1352
      %v1389 = vmul.f32 %v1281, %v1352
      %v1390 = vmul.f32 %v1282, %v1353
      %v1391 = vmul.f32 %v1283, %v1353
      %v1392 = vmul.f32 %v1284, %v1354
      %v1393 = vmul.f32 %v1285, %v1354
      %v1394 = vmul.f32 %v1286, %v1355
      %v1395 = vmul.f32 %v1287, %v1355
      %v1416 = vrot.slane %v1376, 7
      %v1417 = vrot.slane %v1377, 7
      %v1418 = vsel %vm916, %v1416, %v1417
      %v1419 = vrot.slane %v1378, 7
      %v1420 = vrot.slane %v1379, 7
      %v1421 = vsel %vm916, %v1419, %v1420
      %v1422 = vrot.slane %v1380, 7
      %v1423 = vrot.slane %v1381, 7
      %v1424 = vsel %vm916, %v1422, %v1423
      %v1425 = vrot.slane %v1382, 7
      %v1426 = vrot.slane %v1383, 7
      %v1427 = vsel %vm916, %v1425, %v1426
      %v1428 = vrot.slane %v1384, 7
      %v1429 = vrot.slane %v1385, 7
      %v1430 = vsel %vm916, %v1428, %v1429
      %v1431 = vrot.slane %v1386, 7
      %v1432 = vrot.slane %v1387, 7
      %v1433 = vsel %vm916, %v1431, %v1432
      %v1434 = vrot.slane %v1388, 7
      %v1435 = vrot.slane %v1389, 7
      %v1436 = vsel %vm916, %v1434, %v1435
      %v1437 = vrot.slane %v1390, 7
      %v1438 = vrot.slane %v1391, 7
      %v1439 = vsel %vm916, %v1437, %v1438
      %v1440 = vrot.slane %v1392, 7
      %v1441 = vrot.slane %v1393, 7
      %v1442 = vsel %vm916, %v1440, %v1441
      %v1443 = vrot.slane %v1394, 7
      %v1444 = vrot.slane %v1395, 7
      %v1445 = vsel %vm916, %v1443, %v1444
      %1446 = vrot.lane.b32.xlu0 %v1416, 112
      %v1447 = vpop.permute.xlu0 %1446
      %1448 = vrot.lane.b32.xlu0 %v1418, 112
      %v1449 = vpop.permute.xlu0 %1448
      %1450 = vrot.lane.b32.xlu0 %v1419, 112
      %v1451 = vpop.permute.xlu0 %1450
      %1452 = vrot.lane.b32.xlu0 %v1421, 112
      %v1453 = vpop.permute.xlu0 %1452
      %1454 = vrot.lane.b32.xlu0 %v1422, 112
      %v1455 = vpop.permute.xlu0 %1454
      %1456 = vrot.lane.b32.xlu0 %v1424, 112
      %v1457 = vpop.permute.xlu0 %1456
      %1458 = vrot.lane.b32.xlu0 %v1425, 112
      %v1459 = vpop.permute.xlu0 %1458
      %1460 = vrot.lane.b32.xlu0 %v1427, 112
      %v1461 = vpop.permute.xlu0 %1460
      %1462 = vrot.lane.b32.xlu0 %v1428, 112
      %v1463 = vpop.permute.xlu0 %1462
      %1464 = vrot.lane.b32.xlu0 %v1430, 112
      %v1465 = vpop.permute.xlu0 %1464
      %1466 = vrot.lane.b32.xlu0 %v1431, 112
      %v1467 = vpop.permute.xlu0 %1466
      %1468 = vrot.lane.b32.xlu0 %v1433, 112
      %v1469 = vpop.permute.xlu0 %1468
      %1470 = vrot.lane.b32.xlu0 %v1434, 112
      %v1471 = vpop.permute.xlu0 %1470
      %1472 = vrot.lane.b32.xlu0 %v1436, 112
      %v1473 = vpop.permute.xlu0 %1472
      %1474 = vrot.lane.b32.xlu0 %v1437, 112
      %v1475 = vpop.permute.xlu0 %1474
      %1476 = vrot.lane.b32.xlu0 %v1439, 112
      %v1477 = vpop.permute.xlu0 %1476
      %1478 = vrot.lane.b32.xlu0 %v1440, 112
      %v1479 = vpop.permute.xlu0 %1478
      %1480 = vrot.lane.b32.xlu0 %v1442, 112
      %v1481 = vpop.permute.xlu0 %1480
      %1482 = vrot.lane.b32.xlu0 %v1443, 112
      %v1483 = vpop.permute.xlu0 %1482
      %1484 = vrot.lane.b32.xlu0 %v1445, 112
      %v1485 = vpop.permute.xlu0 %1484
      %v1506 = vsel %vm916, 0.0, %v1447
      %v1507 = vsel %vm916, 0.0, %v1451
      %v1508 = vsel %vm916, 0.0, %v1455
      %v1509 = vsel %vm916, 0.0, %v1459
      %v1510 = vsel %vm916, 0.0, %v1463
      %v1511 = vsel %vm916, 0.0, %v1467
      %v1512 = vsel %vm916, 0.0, %v1471
      %v1513 = vsel %vm916, 0.0, %v1475
      %v1514 = vsel %vm916, 0.0, %v1479
      %v1515 = vsel %vm916, 0.0, %v1483
      %v1536 = vrot.slane %v1356, 1
      %v1537 = vrot.slane %v1357, 1
      %v1538 = vsel %vm977, %v1536, %v1537
      %v1539 = vrot.slane %v1358, 1
      %v1540 = vrot.slane %v1359, 1
      %v1541 = vsel %vm977, %v1539, %v1540
      %v1542 = vrot.slane %v1360, 1
      %v1543 = vrot.slane %v1361, 1
      %v1544 = vsel %vm977, %v1542, %v1543
      %v1545 = vrot.slane %v1362, 1
      %v1546 = vrot.slane %v1363, 1
      %v1547 = vsel %vm977, %v1545, %v1546
      %v1548 = vrot.slane %v1364, 1
      %v1549 = vrot.slane %v1365, 1
      %v1550 = vsel %vm977, %v1548, %v1549
      %v1551 = vrot.slane %v1366, 1
      %v1552 = vrot.slane %v1367, 1
      %v1553 = vsel %vm977, %v1551, %v1552
      %v1554 = vrot.slane %v1368, 1
      %v1555 = vrot.slane %v1369, 1
      %v1556 = vsel %vm977, %v1554, %v1555
      %v1557 = vrot.slane %v1370, 1
      %v1558 = vrot.slane %v1371, 1
      %v1559 = vsel %vm977, %v1557, %v1558
      %v1560 = vrot.slane %v1372, 1
      %v1561 = vrot.slane %v1373, 1
      %v1562 = vsel %vm977, %v1560, %v1561
      %v1563 = vrot.slane %v1374, 1
      %v1564 = vrot.slane %v1375, 1
      %v1565 = vsel %vm977, %v1563, %v1564
      %v1576 = vsel %vm977, %v1537, 0.0
      %v1577 = vsel %vm977, %v1540, 0.0
      %v1578 = vsel %vm977, %v1543, 0.0
      %v1579 = vsel %vm977, %v1546, 0.0
      %v1580 = vsel %vm977, %v1549, 0.0
      %v1581 = vsel %vm977, %v1552, 0.0
      %v1582 = vsel %vm977, %v1555, 0.0
      %v1583 = vsel %vm977, %v1558, 0.0
      %v1584 = vsel %vm977, %v1561, 0.0
      %v1585 = vsel %vm977, %v1564, 0.0
      %1586 = vrot.lane.b32.xlu0 %v1356, 8
      %v1587 = vpop.permute.xlu0 %1586
      %1588 = vrot.lane.b32.xlu0 %v1357, 8
      %v1589 = vpop.permute.xlu0 %1588
      %1590 = vrot.lane.b32.xlu0 %v1358, 8
      %v1591 = vpop.permute.xlu0 %1590
      %1592 = vrot.lane.b32.xlu0 %v1359, 8
      %v1593 = vpop.permute.xlu0 %1592
      %1594 = vrot.lane.b32.xlu0 %v1360, 8
      %v1595 = vpop.permute.xlu0 %1594
      %1596 = vrot.lane.b32.xlu0 %v1361, 8
      %v1597 = vpop.permute.xlu0 %1596
      %1598 = vrot.lane.b32.xlu0 %v1362, 8
      %v1599 = vpop.permute.xlu0 %1598
      %1600 = vrot.lane.b32.xlu0 %v1363, 8
      %v1601 = vpop.permute.xlu0 %1600
      %1602 = vrot.lane.b32.xlu0 %v1364, 8
      %v1603 = vpop.permute.xlu0 %1602
      %1604 = vrot.lane.b32.xlu0 %v1365, 8
      %v1605 = vpop.permute.xlu0 %1604
      %1606 = vrot.lane.b32.xlu0 %v1366, 8
      %v1607 = vpop.permute.xlu0 %1606
      %1608 = vrot.lane.b32.xlu0 %v1367, 8
      %v1609 = vpop.permute.xlu0 %1608
      %1610 = vrot.lane.b32.xlu0 %v1368, 8
      %v1611 = vpop.permute.xlu0 %1610
      %1612 = vrot.lane.b32.xlu0 %v1369, 8
      %v1613 = vpop.permute.xlu0 %1612
      %1614 = vrot.lane.b32.xlu0 %v1370, 8
      %v1615 = vpop.permute.xlu0 %1614
      %1616 = vrot.lane.b32.xlu0 %v1371, 8
      %v1617 = vpop.permute.xlu0 %1616
      %1618 = vrot.lane.b32.xlu0 %v1372, 8
      %v1619 = vpop.permute.xlu0 %1618
      %1620 = vrot.lane.b32.xlu0 %v1373, 8
      %v1621 = vpop.permute.xlu0 %1620
      %1622 = vrot.lane.b32.xlu0 %v1374, 8
      %v1623 = vpop.permute.xlu0 %1622
      %1624 = vrot.lane.b32.xlu0 %v1375, 8
      %v1625 = vpop.permute.xlu0 %1624
      %v1646 = vsel %vm670, %v1506, %v1587
      %v1647 = vsel %vm670, %v1449, %v1589
      %v1648 = vsel %vm670, %v1507, %v1591
      %v1649 = vsel %vm670, %v1453, %v1593
      %v1650 = vsel %vm670, %v1508, %v1595
      %v1651 = vsel %vm670, %v1457, %v1597
      %v1652 = vsel %vm670, %v1509, %v1599
      %v1653 = vsel %vm670, %v1461, %v1601
      %v1654 = vsel %vm670, %v1510, %v1603
      %v1655 = vsel %vm670, %v1465, %v1605
      %v1656 = vsel %vm670, %v1511, %v1607
      %v1657 = vsel %vm670, %v1469, %v1609
      %v1658 = vsel %vm670, %v1512, %v1611
      %v1659 = vsel %vm670, %v1473, %v1613
      %v1660 = vsel %vm670, %v1513, %v1615
      %v1661 = vsel %vm670, %v1477, %v1617
      %v1662 = vsel %vm670, %v1514, %v1619
      %v1663 = vsel %vm670, %v1481, %v1621
      %v1664 = vsel %vm670, %v1515, %v1623
      %v1665 = vsel %vm670, %v1485, %v1625
      %vm1666 = vcmask 130048
      %v1667 = vsel %vm1666, %v1646, %v1376
      %v1668 = vsel %vm1666, %v1647, %v1377
      %v1669 = vsel %vm1666, %v1648, %v1378
      %v1670 = vsel %vm1666, %v1649, %v1379
      %v1671 = vsel %vm1666, %v1650, %v1380
      %v1672 = vsel %vm1666, %v1651, %v1381
      %v1673 = vsel %vm1666, %v1652, %v1382
      %v1674 = vsel %vm1666, %v1653, %v1383
      %v1675 = vsel %vm1666, %v1654, %v1384
      %v1676 = vsel %vm1666, %v1655, %v1385
      %v1677 = vsel %vm1666, %v1656, %v1386
      %v1678 = vsel %vm1666, %v1657, %v1387
      %v1679 = vsel %vm1666, %v1658, %v1388
      %v1680 = vsel %vm1666, %v1659, %v1389
      %v1681 = vsel %vm1666, %v1660, %v1390
      %v1682 = vsel %vm1666, %v1661, %v1391
      %v1683 = vsel %vm1666, %v1662, %v1392
      %v1684 = vsel %vm1666, %v1663, %v1393
      %v1685 = vsel %vm1666, %v1664, %v1394
      %v1686 = vsel %vm1666, %v1665, %v1395
      %1687 = vrot.lane.b32.xlu0 %v1376, 120
      %v1688 = vpop.permute.xlu0 %1687
      %1689 = vrot.lane.b32.xlu0 %v1377, 120
      %v1690 = vpop.permute.xlu0 %1689
      %1691 = vrot.lane.b32.xlu0 %v1378, 120
      %v1692 = vpop.permute.xlu0 %1691
      %1693 = vrot.lane.b32.xlu0 %v1379, 120
      %v1694 = vpop.permute.xlu0 %1693
      %1695 = vrot.lane.b32.xlu0 %v1380, 120
      %v1696 = vpop.permute.xlu0 %1695
      %1697 = vrot.lane.b32.xlu0 %v1381, 120
      %v1698 = vpop.permute.xlu0 %1697
      %1699 = vrot.lane.b32.xlu0 %v1382, 120
      %v1700 = vpop.permute.xlu0 %1699
      %1701 = vrot.lane.b32.xlu0 %v1383, 120
      %v1702 = vpop.permute.xlu0 %1701
      %1703 = vrot.lane.b32.xlu0 %v1384, 120
      %v1704 = vpop.permute.xlu0 %1703
      %1705 = vrot.lane.b32.xlu0 %v1385, 120
      %v1706 = vpop.permute.xlu0 %1705
      %1707 = vrot.lane.b32.xlu0 %v1386, 120
      %v1708 = vpop.permute.xlu0 %1707
      %1709 = vrot.lane.b32.xlu0 %v1387, 120
      %v1710 = vpop.permute.xlu0 %1709
      %1711 = vrot.lane.b32.xlu0 %v1388, 120
      %v1712 = vpop.permute.xlu0 %1711
      %1713 = vrot.lane.b32.xlu0 %v1389, 120
      %v1714 = vpop.permute.xlu0 %1713
      %1715 = vrot.lane.b32.xlu0 %v1390, 120
      %v1716 = vpop.permute.xlu0 %1715
      %1717 = vrot.lane.b32.xlu0 %v1391, 120
      %v1718 = vpop.permute.xlu0 %1717
      %1719 = vrot.lane.b32.xlu0 %v1392, 120
      %v1720 = vpop.permute.xlu0 %1719
      %1721 = vrot.lane.b32.xlu0 %v1393, 120
      %v1722 = vpop.permute.xlu0 %1721
      %1723 = vrot.lane.b32.xlu0 %v1394, 120
      %v1724 = vpop.permute.xlu0 %1723
      %1725 = vrot.lane.b32.xlu0 %v1395, 120
      %v1726 = vpop.permute.xlu0 %1725
      %1757 = vrot.lane.b32.xlu0 %v1538, 16
      %v1758 = vpop.permute.xlu0 %1757
      %1759 = vrot.lane.b32.xlu0 %v1576, 16
      %v1760 = vpop.permute.xlu0 %1759
      %1761 = vrot.lane.b32.xlu0 %v1541, 16
      %v1762 = vpop.permute.xlu0 %1761
      %1763 = vrot.lane.b32.xlu0 %v1577, 16
      %v1764 = vpop.permute.xlu0 %1763
      %1765 = vrot.lane.b32.xlu0 %v1544, 16
      %v1766 = vpop.permute.xlu0 %1765
      %1767 = vrot.lane.b32.xlu0 %v1578, 16
      %v1768 = vpop.permute.xlu0 %1767
      %1769 = vrot.lane.b32.xlu0 %v1547, 16
      %v1770 = vpop.permute.xlu0 %1769
      %1771 = vrot.lane.b32.xlu0 %v1579, 16
      %v1772 = vpop.permute.xlu0 %1771
      %1773 = vrot.lane.b32.xlu0 %v1550, 16
      %v1774 = vpop.permute.xlu0 %1773
      %1775 = vrot.lane.b32.xlu0 %v1580, 16
      %v1776 = vpop.permute.xlu0 %1775
      %1777 = vrot.lane.b32.xlu0 %v1553, 16
      %v1778 = vpop.permute.xlu0 %1777
      %1779 = vrot.lane.b32.xlu0 %v1581, 16
      %v1780 = vpop.permute.xlu0 %1779
      %1781 = vrot.lane.b32.xlu0 %v1556, 16
      %v1782 = vpop.permute.xlu0 %1781
      %1783 = vrot.lane.b32.xlu0 %v1582, 16
      %v1784 = vpop.permute.xlu0 %1783
      %1785 = vrot.lane.b32.xlu0 %v1559, 16
      %v1786 = vpop.permute.xlu0 %1785
      %1787 = vrot.lane.b32.xlu0 %v1583, 16
      %v1788 = vpop.permute.xlu0 %1787
      %1789 = vrot.lane.b32.xlu0 %v1562, 16
      %v1790 = vpop.permute.xlu0 %1789
      %1791 = vrot.lane.b32.xlu0 %v1584, 16
      %v1792 = vpop.permute.xlu0 %1791
      %1793 = vrot.lane.b32.xlu0 %v1565, 16
      %v1794 = vpop.permute.xlu0 %1793
      %1795 = vrot.lane.b32.xlu0 %v1585, 16
      %v1796 = vpop.permute.xlu0 %1795
      %v1817 = vsel %vm670, %v1356, %v1688
      %v1818 = vsel %vm670, %v1357, %v1690
      %v1819 = vsel %vm670, %v1358, %v1692
      %v1820 = vsel %vm670, %v1359, %v1694
      %v1821 = vsel %vm670, %v1360, %v1696
      %v1822 = vsel %vm670, %v1361, %v1698
      %v1823 = vsel %vm670, %v1362, %v1700
      %v1824 = vsel %vm670, %v1363, %v1702
      %v1825 = vsel %vm670, %v1364, %v1704
      %v1826 = vsel %vm670, %v1365, %v1706
      %v1827 = vsel %vm670, %v1366, %v1708
      %v1828 = vsel %vm670, %v1367, %v1710
      %v1829 = vsel %vm670, %v1368, %v1712
      %v1830 = vsel %vm670, %v1369, %v1714
      %v1831 = vsel %vm670, %v1370, %v1716
      %v1832 = vsel %vm670, %v1371, %v1718
      %v1833 = vsel %vm670, %v1372, %v1720
      %v1834 = vsel %vm670, %v1373, %v1722
      %v1835 = vsel %vm670, %v1374, %v1724
      %v1836 = vsel %vm670, %v1375, %v1726
      %v1837 = vsel %vm1666, %v1817, %v1758
      %v1838 = vsel %vm1666, %v1818, %v1760
      %v1839 = vsel %vm1666, %v1819, %v1762
      %v1840 = vsel %vm1666, %v1820, %v1764
      %v1841 = vsel %vm1666, %v1821, %v1766
      %v1842 = vsel %vm1666, %v1822, %v1768
      %v1843 = vsel %vm1666, %v1823, %v1770
      %v1844 = vsel %vm1666, %v1824, %v1772
      %v1845 = vsel %vm1666, %v1825, %v1774
      %v1846 = vsel %vm1666, %v1826, %v1776
      %v1847 = vsel %vm1666, %v1827, %v1778
      %v1848 = vsel %vm1666, %v1828, %v1780
      %v1849 = vsel %vm1666, %v1829, %v1782
      %v1850 = vsel %vm1666, %v1830, %v1784
      %v1851 = vsel %vm1666, %v1831, %v1786
      %v1852 = vsel %vm1666, %v1832, %v1788
      %v1853 = vsel %vm1666, %v1833, %v1790
      %v1854 = vsel %vm1666, %v1834, %v1792
      %v1855 = vsel %vm1666, %v1835, %v1794
      %v1856 = vsel %vm1666, %v1836, %v1796
      %v1857 = vld [vmem:[%s6] sm:$0xff]
      %v1858 = vld [vmem:[%s6 + $0x8] sm:$0xff]
      %v1859 = vld [vmem:[%s6 + $0x10] sm:$0xff]
      %s1860 = scalar_lea.vmem %s6, 24
      %v1861 = vld [vmem:[%s1860] sm:$0xff]
      %v1862 = vld [vmem:[%s1860 + $0x8] sm:$0xff]
      %v1863 = vld [vmem:[%s1860 + $0x10] sm:$0xff]
      %vm1864 = vcmask 195584
      %v1866 = vsel %vm1864, %v1669, 0
      %v1869 = vsel %vm1864, %v1670, 0
      %v1872 = vsel %vm1864, %v1671, 0
      %v1875 = vsel %vm1864, %v1672, 0
      %v1878 = vsel %vm1864, %v1673, 0
      %v1881 = vsel %vm1864, %v1674, 0
      %v1884 = vsel %vm1864, %v1675, 0
      %v1887 = vsel %vm1864, %v1676, 0
      %v1890 = vsel %vm1864, %v1677, 0
      %v1893 = vsel %vm1864, %v1678, 0
      %v1896 = vsel %vm1864, %v1679, 0
      %v1899 = vsel %vm1864, %v1680, 0
      %v1902 = vsel %vm1864, %v1681, 0
      %v1905 = vsel %vm1864, %v1682, 0
      %v1908 = vsel %vm1864, %v1683, 0
      %v1911 = vsel %vm1864, %v1684, 0
      %v1914 = vsel %vm1864, %v1839, 0
      %v1917 = vsel %vm1864, %v1840, 0
      %v1920 = vsel %vm1864, %v1841, 0
      %v1923 = vsel %vm1864, %v1842, 0
      %v1926 = vsel %vm1864, %v1843, 0
      %v1929 = vsel %vm1864, %v1844, 0
      %v1932 = vsel %vm1864, %v1845, 0
      %v1935 = vsel %vm1864, %v1846, 0
      %v1938 = vsel %vm1864, %v1847, 0
      %v1941 = vsel %vm1864, %v1848, 0
      %v1944 = vsel %vm1864, %v1849, 0
      %v1947 = vsel %vm1864, %v1850, 0
      %v1950 = vsel %vm1864, %v1851, 0
      %v1953 = vsel %vm1864, %v1852, 0
      %v1956 = vsel %vm1864, %v1853, 0
      %v1959 = vsel %vm1864, %v1854, 0
      %1961 = vmatprep.subr.mxu0 0.0
      %1962 = vmatpush1.msra.mxu0 %v1861
      %1963 = vmatprep.subr.mxu0 0.0
      %1964 = vmatpush1.msra.mxu0 %v1862
      %1965 = vmatprep.subr.mxu0 0.0
      %1966 = vmatpush1.msra.mxu0 %v1863
      %1967 = vmatprep.subr.mxu0 0.0
      %1968 = vmatpush1.msra.mxu0 0.0
      %1969 = vmatprep.subr.mxu0 0.0
      %1970 = vmatpush1.msra.mxu0 0.0
      %1971 = vmatprep.subr.mxu0 0.0
      %1972 = vmatpush1.msra.mxu0 0.0
      %1973 = vmatprep.subr.mxu0 0.0
      %1974 = vmatpush1.msra.mxu0 0.0
      %1975 = vmatprep.subr.mxu0 0.0
      %1976 = vmatpush1.msra.mxu0 0.0
      %1977 = vmatprep.subr.mxu0 0.0
      %1978 = vmatpush1.msra.mxu0 0.0
      %1979 = vmatprep.subr.mxu0 0.0
      %1980 = vmatpush1.msra.mxu0 0.0
      %1981 = vmatprep.subr.mxu0 0.0
      %1982 = vmatpush1.msra.mxu0 0.0
      %1983 = vmatprep.subr.mxu0 0.0
      %1984 = vmatpush1.msra.mxu0 0.0
      %1985 = vmatprep.subr.mxu0 0.0
      %1986 = vmatpush1.msra.mxu0 0.0
      %1987 = vmatprep.subr.mxu0 0.0
      %1988 = vmatpush1.msra.mxu0 0.0
      %1989 = vmatprep.subr.mxu0 0.0
      %1990 = vmatpush1.msra.mxu0 0.0
      %1991 = vmatprep.subr.mxu0 0.0
      %1992 = vmatpush1.msra.mxu0 0.0
      %1993 = vmatprep.subr.mxu0 0.0
      %1994 = vmatpush1.msra.mxu0 0.0
      %1995 = vmatprep.subr.mxu0 0.0
      %1996 = vmatpush1.msra.mxu0 0.0
      %1997 = vmatprep.subr.mxu0 0.0
      %1998 = vmatpush1.msra.mxu0 0.0
      %1999 = vmatprep.subr.mxu0 0.0
      %2000 = vmatpush1.msra.mxu0 0.0
      %2001 = vmatprep.subr.mxu0 0.0
      %2002 = vmatpush1.msra.mxu0 0.0
      %2003 = vmatprep.subr.mxu0 0.0
      %2004 = vmatpush1.msra.mxu0 0.0
      %2005 = vmatprep.subr.mxu0 0.0
      %2006 = vmatpush1.msra.mxu0 0.0
      %2007 = vmatprep.subr.mxu0 0.0
      %2008 = vmatpush1.msra.mxu0 0.0
      %2009 = vmatprep.subr.mxu0 0.0
      %2010 = vmatpush1.msra.mxu0 0.0
      %2011 = vmatprep.subr.mxu0 0.0
      %2012 = vmatpush1.msra.mxu0 0.0
      %2013 = vmatprep.subr.mxu0 0.0
      %2014 = vmatpush1.msra.mxu0 0.0
      %2015 = vmatprep.subr.mxu0 0.0
      %2016 = vmatpush1.msra.mxu0 0.0
      %2017 = vmatprep.subr.mxu0 0.0
      %2018 = vmatpush1.msra.mxu0 0.0
      %2019 = vmatprep.subr.mxu0 0.0
      %2020 = vmatpush1.msra.mxu0 0.0
      %2021 = vmatprep.subr.mxu0 0.0
      %2022 = vmatpush1.msra.mxu0 0.0
      %2023 = vmatprep.subr.mxu0 0.0
      %2024 = vmatpush1.msra.mxu0 0.0
      %2025 = vmatprep.mubr.f32.mxu0 0.0
      %2026 = vmatmul.mubr.f32.gmra.mrb[0].mxu0 %v1866
      %v2027 = vpop.f32.mrb[0].mxu0
      %v2028 = vadd.f32 0.0, %v2027
      %v2029 = vpop.f32.mrb[0].mxu0
      %2030 = vmatprep.mubr.f32.mxu0 0.0
      %2031 = vmatmul.mubr.f32.gmra.mrb[0].mxu0 %v1869
      %v2032 = vpop.f32.mrb[0].mxu0
      %v2033 = vadd.f32 0.0, %v2032
      %v2034 = vpop.f32.mrb[0].mxu0
      %2035 = vmatprep.mubr.f32.mxu0 0.0
      %2036 = vmatmul.mubr.f32.gmra.mrb[0].mxu0 %v1872
      %v2037 = vpop.f32.mrb[0].mxu0
      %v2038 = vadd.f32 0.0, %v2037
      %v2039 = vpop.f32.mrb[0].mxu0
      %2040 = vmatprep.mubr.f32.mxu0 0.0
      %2041 = vmatmul.mubr.f32.gmra.mrb[0].mxu0 %v1875
      %v2042 = vpop.f32.mrb[0].mxu0
      %v2043 = vadd.f32 0.0, %v2042
      %v2044 = vpop.f32.mrb[0].mxu0
      %2045 = vmatprep.mubr.f32.mxu0 0.0
      %2046 = vmatmul.mubr.f32.gmra.mrb[0].mxu0 %v1878
      %v2047 = vpop.f32.mrb[0].mxu0
      %v2048 = vadd.f32 0.0, %v2047
      %v2049 = vpop.f32.mrb[0].mxu0
      %2050 = vmatprep.mubr.f32.mxu0 0.0
      %2051 = vmatmul.mubr.f32.gmra.mrb[0].mxu0 %v1881
      %v2052 = vpop.f32.mrb[0].mxu0
      %v2053 = vadd.f32 0.0, %v2052
      %v2054 = vpop.f32.mrb[0].mxu0
      %2055 = vmatprep.mubr.f32.mxu0 0.0
      %2056 = vmatmul.mubr.f32.gmra.mrb[0].mxu0 %v1884
      %v2057 = vpop.f32.mrb[0].mxu0
      %v2058 = vadd.f32 0.0, %v2057
      %v2059 = vpop.f32.mrb[0].mxu0
      %2060 = vmatprep.mubr.f32.mxu0 0.0
      %2061 = vmatmul.mubr.f32.gmra.mrb[0].mxu0 %v1887
      %v2062 = vpop.f32.mrb[0].mxu0
      %v2063 = vadd.f32 0.0, %v2062
      %v2064 = vpop.f32.mrb[0].mxu0
      %2065 = vmatprep.mubr.f32.mxu0 0.0
      %2066 = vmatmul.mubr.f32.gmra.mrb[0].mxu0 %v1890
      %v2067 = vpop.f32.mrb[0].mxu0
      %v2068 = vadd.f32 0.0, %v2067
      %v2069 = vpop.f32.mrb[0].mxu0
      %2070 = vmatprep.mubr.f32.mxu0 0.0
      %2071 = vmatmul.mubr.f32.gmra.mrb[0].mxu0 %v1893
      %v2072 = vpop.f32.mrb[0].mxu0
      %v2073 = vadd.f32 0.0, %v2072
      %v2074 = vpop.f32.mrb[0].mxu0
      %2075 = vmatprep.mubr.f32.mxu0 0.0
      %2076 = vmatmul.mubr.f32.gmra.mrb[0].mxu0 %v1896
      %v2077 = vpop.f32.mrb[0].mxu0
      %v2078 = vadd.f32 0.0, %v2077
      %v2079 = vpop.f32.mrb[0].mxu0
      %2080 = vmatprep.mubr.f32.mxu0 0.0
      %2081 = vmatmul.mubr.f32.gmra.mrb[0].mxu0 %v1899
      %v2082 = vpop.f32.mrb[0].mxu0
      %v2083 = vadd.f32 0.0, %v2082
      %v2084 = vpop.f32.mrb[0].mxu0
      %2085 = vmatprep.mubr.f32.mxu0 0.0
      %2086 = vmatmul.mubr.f32.gmra.mrb[0].mxu0 %v1902
      %v2087 = vpop.f32.mrb[0].mxu0
      %v2088 = vadd.f32 0.0, %v2087
      %v2089 = vpop.f32.mrb[0].mxu0
      %2090 = vmatprep.mubr.f32.mxu0 0.0
      %2091 = vmatmul.mubr.f32.gmra.mrb[0].mxu0 %v1905
      %v2092 = vpop.f32.mrb[0].mxu0
      %v2093 = vadd.f32 0.0, %v2092
      %v2094 = vpop.f32.mrb[0].mxu0
      %2095 = vmatprep.mubr.f32.mxu0 0.0
      %2096 = vmatmul.mubr.f32.gmra.mrb[0].mxu0 %v1908
      %v2097 = vpop.f32.mrb[0].mxu0
      %v2098 = vadd.f32 0.0, %v2097
      %v2099 = vpop.f32.mrb[0].mxu0
      %2100 = vmatprep.mubr.f32.mxu0 0.0
      %2101 = vmatmul.mubr.f32.gmra.mrb[0].mxu0 %v1911
      %v2102 = vpop.f32.mrb[0].mxu0
      %v2103 = vadd.f32 0.0, %v2102
      %v2104 = vpop.f32.mrb[0].mxu0
      %2105 = vmatprep.mubr.f32.mxu0 0.0
      %2106 = vmatmul.mubr.f32.gmra.mrb[0].mxu0 %v1914
      %v2107 = vpop.f32.mrb[0].mxu0
      %v2108 = vadd.f32 0.0, %v2107
      %v2109 = vpop.f32.mrb[0].mxu0
      %2110 = vmatprep.mubr.f32.mxu0 0.0
      %2111 = vmatmul.mubr.f32.gmra.mrb[0].mxu0 %v1917
      %v2112 = vpop.f32.mrb[0].mxu0
      %v2113 = vadd.f32 0.0, %v2112
      %v2114 = vpop.f32.mrb[0].mxu0
      %2115 = vmatprep.mubr.f32.mxu0 0.0
      %2116 = vmatmul.mubr.f32.gmra.mrb[0].mxu0 %v1920
      %v2117 = vpop.f32.mrb[0].mxu0
      %v2118 = vadd.f32 0.0, %v2117
      %v2119 = vpop.f32.mrb[0].mxu0
      %2120 = vmatprep.mubr.f32.mxu0 0.0
      %2121 = vmatmul.mubr.f32.gmra.mrb[0].mxu0 %v1923
      %v2122 = vpop.f32.mrb[0].mxu0
      %v2123 = vadd.f32 0.0, %v2122
      %v2124 = vpop.f32.mrb[0].mxu0
      %2125 = vmatprep.mubr.f32.mxu0 0.0
      %2126 = vmatmul.mubr.f32.gmra.mrb[0].mxu0 %v1926
      %v2127 = vpop.f32.mrb[0].mxu0
      %v2128 = vadd.f32 0.0, %v2127
      %v2129 = vpop.f32.mrb[0].mxu0
      %2130 = vmatprep.mubr.f32.mxu0 0.0
      %2131 = vmatmul.mubr.f32.gmra.mrb[0].mxu0 %v1929
      %v2132 = vpop.f32.mrb[0].mxu0
      %v2133 = vadd.f32 0.0, %v2132
      %v2134 = vpop.f32.mrb[0].mxu0
      %2135 = vmatprep.mubr.f32.mxu0 0.0
      %2136 = vmatmul.mubr.f32.gmra.mrb[0].mxu0 %v1932
      %v2137 = vpop.f32.mrb[0].mxu0
      %v2138 = vadd.f32 0.0, %v2137
      %v2139 = vpop.f32.mrb[0].mxu0
      %2140 = vmatprep.mubr.f32.mxu0 0.0
      %2141 = vmatmul.mubr.f32.gmra.mrb[0].mxu0 %v1935
      %v2142 = vpop.f32.mrb[0].mxu0
      %v2143 = vadd.f32 0.0, %v2142
      %v2144 = vpop.f32.mrb[0].mxu0
      %2145 = vmatprep.mubr.f32.mxu0 0.0
      %2146 = vmatmul.mubr.f32.gmra.mrb[0].mxu0 %v1938
      %v2147 = vpop.f32.mrb[0].mxu0
      %v2148 = vadd.f32 0.0, %v2147
      %v2149 = vpop.f32.mrb[0].mxu0
      %2150 = vmatprep.mubr.f32.mxu0 0.0
      %2151 = vmatmul.mubr.f32.gmra.mrb[0].mxu0 %v1941
      %v2152 = vpop.f32.mrb[0].mxu0
      %v2153 = vadd.f32 0.0, %v2152
      %v2154 = vpop.f32.mrb[0].mxu0
      %2155 = vmatprep.mubr.f32.mxu0 0.0
      %2156 = vmatmul.mubr.f32.gmra.mrb[0].mxu0 %v1944
      %v2157 = vpop.f32.mrb[0].mxu0
      %v2158 = vadd.f32 0.0, %v2157
      %v2159 = vpop.f32.mrb[0].mxu0
      %2160 = vmatprep.mubr.f32.mxu0 0.0
      %2161 = vmatmul.mubr.f32.gmra.mrb[0].mxu0 %v1947
      %v2162 = vpop.f32.mrb[0].mxu0
      %v2163 = vadd.f32 0.0, %v2162
      %v2164 = vpop.f32.mrb[0].mxu0
      %2165 = vmatprep.mubr.f32.mxu0 0.0
      %2166 = vmatmul.mubr.f32.gmra.mrb[0].mxu0 %v1950
      %v2167 = vpop.f32.mrb[0].mxu0
      %v2168 = vadd.f32 0.0, %v2167
      %v2169 = vpop.f32.mrb[0].mxu0
      %2170 = vmatprep.mubr.f32.mxu0 0.0
      %2171 = vmatmul.mubr.f32.gmra.mrb[0].mxu0 %v1953
      %v2172 = vpop.f32.mrb[0].mxu0
      %v2173 = vadd.f32 0.0, %v2172
      %v2174 = vpop.f32.mrb[0].mxu0
      %2175 = vmatprep.mubr.f32.mxu0 0.0
      %2176 = vmatmul.mubr.f32.gmra.mrb[0].mxu0 %v1956
      %v2177 = vpop.f32.mrb[0].mxu0
      %v2178 = vadd.f32 0.0, %v2177
      %v2179 = vpop.f32.mrb[0].mxu0
      %2180 = vmatprep.mubr.f32.mxu0 0.0
      %2181 = vmatmul.mubr.f32.gmra.mrb[0].mxu0 %v1959
      %v2182 = vpop.f32.mrb[0].mxu0
      %v2183 = vadd.f32 0.0, %v2182
      %v2184 = vpop.f32.mrb[0].mxu0
      %2185 = vdwg.mxu0
      %v2187 = vsel %vm1864, %v1667, 0
      %v2190 = vsel %vm1864, %v1668, 0
      %v2193 = vsel %vm1864, %v1837, 0
      %v2196 = vsel %vm1864, %v1838, 0
      %2198 = vmatprep.subr.mxu0 0.0
      %2199 = vmatpush1.msra.mxu0 %v1857
      %2200 = vmatprep.subr.mxu0 0.0
      %2201 = vmatpush1.msra.mxu0 %v1858
      %2202 = vmatprep.subr.mxu0 0.0
      %2203 = vmatpush1.msra.mxu0 %v1859
      %2204 = vmatprep.subr.mxu0 0.0
      %2205 = vmatpush1.msra.mxu0 0.0
      %2206 = vmatprep.subr.mxu0 0.0
      %2207 = vmatpush1.msra.mxu0 0.0
      %2208 = vmatprep.subr.mxu0 0.0
      %2209 = vmatpush1.msra.mxu0 0.0
      %2210 = vmatprep.subr.mxu0 0.0
      %2211 = vmatpush1.msra.mxu0 0.0
      %2212 = vmatprep.subr.mxu0 0.0
      %2213 = vmatpush1.msra.mxu0 0.0
      %2214 = vmatprep.subr.mxu0 0.0
      %2215 = vmatpush1.msra.mxu0 0.0
      %2216 = vmatprep.subr.mxu0 0.0
      %2217 = vmatpush1.msra.mxu0 0.0
      %2218 = vmatprep.subr.mxu0 0.0
      %2219 = vmatpush1.msra.mxu0 0.0
      %2220 = vmatprep.subr.mxu0 0.0
      %2221 = vmatpush1.msra.mxu0 0.0
      %2222 = vmatprep.subr.mxu0 0.0
      %2223 = vmatpush1.msra.mxu0 0.0
      %2224 = vmatprep.subr.mxu0 0.0
      %2225 = vmatpush1.msra.mxu0 0.0
      %2226 = vmatprep.subr.mxu0 0.0
      %2227 = vmatpush1.msra.mxu0 0.0
      %2228 = vmatprep.subr.mxu0 0.0
      %2229 = vmatpush1.msra.mxu0 0.0
      %2230 = vmatprep.subr.mxu0 0.0
      %2231 = vmatpush1.msra.mxu0 0.0
      %2232 = vmatprep.subr.mxu0 0.0
      %2233 = vmatpush1.msra.mxu0 0.0
      %2234 = vmatprep.subr.mxu0 0.0
      %2235 = vmatpush1.msra.mxu0 0.0
      %2236 = vmatprep.subr.mxu0 0.0
      %2237 = vmatpush1.msra.mxu0 0.0
      %2238 = vmatprep.subr.mxu0 0.0
      %2239 = vmatpush1.msra.mxu0 0.0
      %2240 = vmatprep.subr.mxu0 0.0
      %2241 = vmatpush1.msra.mxu0 0.0
      %2242 = vmatprep.subr.mxu0 0.0
      %2243 = vmatpush1.msra.mxu0 0.0
      %2244 = vmatprep.subr.mxu0 0.0
      %2245 = vmatpush1.msra.mxu0 0.0
      %2246 = vmatprep.subr.mxu0 0.0
      %2247 = vmatpush1.msra.mxu0 0.0
      %2248 = vmatprep.subr.mxu0 0.0
      %2249 = vmatpush1.msra.mxu0 0.0
      %2250 = vmatprep.subr.mxu0 0.0
      %2251 = vmatpush1.msra.mxu0 0.0
      %2252 = vmatprep.subr.mxu0 0.0
      %2253 = vmatpush1.msra.mxu0 0.0
      %2254 = vmatprep.subr.mxu0 0.0
      %2255 = vmatpush1.msra.mxu0 0.0
      %2256 = vmatprep.subr.mxu0 0.0
      %2257 = vmatpush1.msra.mxu0 0.0
      %2258 = vmatprep.subr.mxu0 0.0
      %2259 = vmatpush1.msra.mxu0 0.0
      %2260 = vmatprep.subr.mxu0 0.0
      %2261 = vmatpush1.msra.mxu0 0.0
      %2262 = vmatprep.mubr.f32.mxu0 0.0
      %2263 = vmatmul.mubr.f32.gmra.mrb[0].mxu0 %v2187
      %v2264 = vpop.f32.mrb[0].mxu0
      %v2265 = vadd.f32 %v2028, %v2264
      %v2266 = vpop.f32.mrb[0].mxu0
      %2267 = vmatprep.mubr.f32.mxu0 0.0
      %2268 = vmatmul.mubr.f32.gmra.mrb[0].mxu0 %v2190
      %v2269 = vpop.f32.mrb[0].mxu0
      %v2270 = vadd.f32 %v2033, %v2269
      %v2271 = vpop.f32.mrb[0].mxu0
      %2272 = vmatprep.mubr.f32.mxu0 0.0
      %2273 = vmatmul.mubr.f32.gmra.mrb[0].mxu0 %v1866
      %v2274 = vpop.f32.mrb[0].mxu0
      %v2275 = vadd.f32 %v2038, %v2274
      %v2276 = vpop.f32.mrb[0].mxu0
      %2277 = vmatprep.mubr.f32.mxu0 0.0
      %2278 = vmatmul.mubr.f32.gmra.mrb[0].mxu0 %v1869
      %v2279 = vpop.f32.mrb[0].mxu0
      %v2280 = vadd.f32 %v2043, %v2279
      %v2281 = vpop.f32.mrb[0].mxu0
      %2282 = vmatprep.mubr.f32.mxu0 0.0
      %2283 = vmatmul.mubr.f32.gmra.mrb[0].mxu0 %v1872
      %v2284 = vpop.f32.mrb[0].mxu0
      %v2285 = vadd.f32 %v2048, %v2284
      %v2286 = vpop.f32.mrb[0].mxu0
      %2287 = vmatprep.mubr.f32.mxu0 0.0
      %2288 = vmatmul.mubr.f32.gmra.mrb[0].mxu0 %v1875
      %v2289 = vpop.f32.mrb[0].mxu0
      %v2290 = vadd.f32 %v2053, %v2289
      %v2291 = vpop.f32.mrb[0].mxu0
      %2292 = vmatprep.mubr.f32.mxu0 0.0
      %2293 = vmatmul.mubr.f32.gmra.mrb[0].mxu0 %v1878
      %v2294 = vpop.f32.mrb[0].mxu0
      %v2295 = vadd.f32 %v2058, %v2294
      %v2296 = vpop.f32.mrb[0].mxu0
      %2297 = vmatprep.mubr.f32.mxu0 0.0
      %2298 = vmatmul.mubr.f32.gmra.mrb[0].mxu0 %v1881
      %v2299 = vpop.f32.mrb[0].mxu0
      %v2300 = vadd.f32 %v2063, %v2299
      %v2301 = vpop.f32.mrb[0].mxu0
      %2302 = vmatprep.mubr.f32.mxu0 0.0
      %2303 = vmatmul.mubr.f32.gmra.mrb[0].mxu0 %v1884
      %v2304 = vpop.f32.mrb[0].mxu0
      %v2305 = vadd.f32 %v2068, %v2304
      %v2306 = vpop.f32.mrb[0].mxu0
      %2307 = vmatprep.mubr.f32.mxu0 0.0
      %2308 = vmatmul.mubr.f32.gmra.mrb[0].mxu0 %v1887
      %v2309 = vpop.f32.mrb[0].mxu0
      %v2310 = vadd.f32 %v2073, %v2309
      %v2311 = vpop.f32.mrb[0].mxu0
      %2312 = vmatprep.mubr.f32.mxu0 0.0
      %2313 = vmatmul.mubr.f32.gmra.mrb[0].mxu0 %v1890
      %v2314 = vpop.f32.mrb[0].mxu0
      %v2315 = vadd.f32 %v2078, %v2314
      %v2316 = vpop.f32.mrb[0].mxu0
      %2317 = vmatprep.mubr.f32.mxu0 0.0
      %2318 = vmatmul.mubr.f32.gmra.mrb[0].mxu0 %v1893
      %v2319 = vpop.f32.mrb[0].mxu0
      %v2320 = vadd.f32 %v2083, %v2319
      %v2321 = vpop.f32.mrb[0].mxu0
      %2322 = vmatprep.mubr.f32.mxu0 0.0
      %2323 = vmatmul.mubr.f32.gmra.mrb[0].mxu0 %v1896
      %v2324 = vpop.f32.mrb[0].mxu0
      %v2325 = vadd.f32 %v2088, %v2324
      %v2326 = vpop.f32.mrb[0].mxu0
      %2327 = vmatprep.mubr.f32.mxu0 0.0
      %2328 = vmatmul.mubr.f32.gmra.mrb[0].mxu0 %v1899
      %v2329 = vpop.f32.mrb[0].mxu0
      %v2330 = vadd.f32 %v2093, %v2329
      %v2331 = vpop.f32.mrb[0].mxu0
      %2332 = vmatprep.mubr.f32.mxu0 0.0
      %2333 = vmatmul.mubr.f32.gmra.mrb[0].mxu0 %v1902
      %v2334 = vpop.f32.mrb[0].mxu0
      %v2335 = vadd.f32 %v2098, %v2334
      %v2336 = vpop.f32.mrb[0].mxu0
      %2337 = vmatprep.mubr.f32.mxu0 0.0
      %2338 = vmatmul.mubr.f32.gmra.mrb[0].mxu0 %v1905
      %v2339 = vpop.f32.mrb[0].mxu0
      %v2340 = vadd.f32 %v2103, %v2339
      %v2341 = vpop.f32.mrb[0].mxu0
      %2342 = vmatprep.mubr.f32.mxu0 0.0
      %2343 = vmatmul.mubr.f32.gmra.mrb[0].mxu0 %v2193
      %v2344 = vpop.f32.mrb[0].mxu0
      %v2345 = vadd.f32 %v2108, %v2344
      %v2346 = vpop.f32.mrb[0].mxu0
      %2347 = vmatprep.mubr.f32.mxu0 0.0
      %2348 = vmatmul.mubr.f32.gmra.mrb[0].mxu0 %v2196
      %v2349 = vpop.f32.mrb[0].mxu0
      %v2350 = vadd.f32 %v2113, %v2349
      %v2351 = vpop.f32.mrb[0].mxu0
      %2352 = vmatprep.mubr.f32.mxu0 0.0
      %2353 = vmatmul.mubr.f32.gmra.mrb[0].mxu0 %v1914
      %v2354 = vpop.f32.mrb[0].mxu0
      %v2355 = vadd.f32 %v2118, %v2354
      %v2356 = vpop.f32.mrb[0].mxu0
      %2357 = vmatprep.mubr.f32.mxu0 0.0
      %2358 = vmatmul.mubr.f32.gmra.mrb[0].mxu0 %v1917
      %v2359 = vpop.f32.mrb[0].mxu0
      %v2360 = vadd.f32 %v2123, %v2359
      %v2361 = vpop.f32.mrb[0].mxu0
      %2362 = vmatprep.mubr.f32.mxu0 0.0
      %2363 = vmatmul.mubr.f32.gmra.mrb[0].mxu0 %v1920
      %v2364 = vpop.f32.mrb[0].mxu0
      %v2365 = vadd.f32 %v2128, %v2364
      %v2366 = vpop.f32.mrb[0].mxu0
      %2367 = vmatprep.mubr.f32.mxu0 0.0
      %2368 = vmatmul.mubr.f32.gmra.mrb[0].mxu0 %v1923
      %v2369 = vpop.f32.mrb[0].mxu0
      %v2370 = vadd.f32 %v2133, %v2369
      %v2371 = vpop.f32.mrb[0].mxu0
      %2372 = vmatprep.mubr.f32.mxu0 0.0
      %2373 = vmatmul.mubr.f32.gmra.mrb[0].mxu0 %v1926
      %v2374 = vpop.f32.mrb[0].mxu0
      %v2375 = vadd.f32 %v2138, %v2374
      %v2376 = vpop.f32.mrb[0].mxu0
      %2377 = vmatprep.mubr.f32.mxu0 0.0
      %2378 = vmatmul.mubr.f32.gmra.mrb[0].mxu0 %v1929
      %v2379 = vpop.f32.mrb[0].mxu0
      %v2380 = vadd.f32 %v2143, %v2379
      %v2381 = vpop.f32.mrb[0].mxu0
      %2382 = vmatprep.mubr.f32.mxu0 0.0
      %2383 = vmatmul.mubr.f32.gmra.mrb[0].mxu0 %v1932
      %v2384 = vpop.f32.mrb[0].mxu0
      %v2385 = vadd.f32 %v2148, %v2384
      %v2386 = vpop.f32.mrb[0].mxu0
      %2387 = vmatprep.mubr.f32.mxu0 0.0
      %2388 = vmatmul.mubr.f32.gmra.mrb[0].mxu0 %v1935
      %v2389 = vpop.f32.mrb[0].mxu0
      %v2390 = vadd.f32 %v2153, %v2389
      %v2391 = vpop.f32.mrb[0].mxu0
      %2392 = vmatprep.mubr.f32.mxu0 0.0
      %2393 = vmatmul.mubr.f32.gmra.mrb[0].mxu0 %v1938
      %v2394 = vpop.f32.mrb[0].mxu0
      %v2395 = vadd.f32 %v2158, %v2394
      %v2396 = vpop.f32.mrb[0].mxu0
      %2397 = vmatprep.mubr.f32.mxu0 0.0
      %2398 = vmatmul.mubr.f32.gmra.mrb[0].mxu0 %v1941
      %v2399 = vpop.f32.mrb[0].mxu0
      %v2400 = vadd.f32 %v2163, %v2399
      %v2401 = vpop.f32.mrb[0].mxu0
      %2402 = vmatprep.mubr.f32.mxu0 0.0
      %2403 = vmatmul.mubr.f32.gmra.mrb[0].mxu0 %v1944
      %v2404 = vpop.f32.mrb[0].mxu0
      %v2405 = vadd.f32 %v2168, %v2404
      %v2406 = vpop.f32.mrb[0].mxu0
      %2407 = vmatprep.mubr.f32.mxu0 0.0
      %2408 = vmatmul.mubr.f32.gmra.mrb[0].mxu0 %v1947
      %v2409 = vpop.f32.mrb[0].mxu0
      %v2410 = vadd.f32 %v2173, %v2409
      %v2411 = vpop.f32.mrb[0].mxu0
      %2412 = vmatprep.mubr.f32.mxu0 0.0
      %2413 = vmatmul.mubr.f32.gmra.mrb[0].mxu0 %v1950
      %v2414 = vpop.f32.mrb[0].mxu0
      %v2415 = vadd.f32 %v2178, %v2414
      %v2416 = vpop.f32.mrb[0].mxu0
      %2417 = vmatprep.mubr.f32.mxu0 0.0
      %2418 = vmatmul.mubr.f32.gmra.mrb[0].mxu0 %v1953
      %v2419 = vpop.f32.mrb[0].mxu0
      %v2420 = vadd.f32 %v2183, %v2419
      %v2421 = vpop.f32.mrb[0].mxu0
      %2422 = vdwg.mxu0
      %s2423 = scalar_lea.vmem %s6, 48
      %v2424 = vld [vmem:[%s2423] sm:$0xff]
      %v2425 = vld [vmem:[%s2423 + $0x8] sm:$0xff]
      %v2426 = vld [vmem:[%s2423 + $0x10] sm:$0xff]
      %v2428 = vsel %vm1864, %v1685, 0
      %v2431 = vsel %vm1864, %v1686, 0
      %v2434 = vsel %vm1864, %v1855, 0
      %v2437 = vsel %vm1864, %v1856, 0
      %2439 = vmatprep.subr.mxu0 0.0
      %2440 = vmatpush1.msra.mxu0 %v2424
      %2441 = vmatprep.subr.mxu0 0.0
      %2442 = vmatpush1.msra.mxu0 %v2425
      %2443 = vmatprep.subr.mxu0 0.0
      %2444 = vmatpush1.msra.mxu0 %v2426
      %2445 = vmatprep.subr.mxu0 0.0
      %2446 = vmatpush1.msra.mxu0 0.0
      %2447 = vmatprep.subr.mxu0 0.0
      %2448 = vmatpush1.msra.mxu0 0.0
      %2449 = vmatprep.subr.mxu0 0.0
      %2450 = vmatpush1.msra.mxu0 0.0
      %2451 = vmatprep.subr.mxu0 0.0
      %2452 = vmatpush1.msra.mxu0 0.0
      %2453 = vmatprep.subr.mxu0 0.0
      %2454 = vmatpush1.msra.mxu0 0.0
      %2455 = vmatprep.subr.mxu0 0.0
      %2456 = vmatpush1.msra.mxu0 0.0
      %2457 = vmatprep.subr.mxu0 0.0
      %2458 = vmatpush1.msra.mxu0 0.0
      %2459 = vmatprep.subr.mxu0 0.0
      %2460 = vmatpush1.msra.mxu0 0.0
      %2461 = vmatprep.subr.mxu0 0.0
      %2462 = vmatpush1.msra.mxu0 0.0
      %2463 = vmatprep.subr.mxu0 0.0
      %2464 = vmatpush1.msra.mxu0 0.0
      %2465 = vmatprep.subr.mxu0 0.0
      %2466 = vmatpush1.msra.mxu0 0.0
      %2467 = vmatprep.subr.mxu0 0.0
      %2468 = vmatpush1.msra.mxu0 0.0
      %2469 = vmatprep.subr.mxu0 0.0
      %2470 = vmatpush1.msra.mxu0 0.0
      %2471 = vmatprep.subr.mxu0 0.0
      %2472 = vmatpush1.msra.mxu0 0.0
      %2473 = vmatprep.subr.mxu0 0.0
      %2474 = vmatpush1.msra.mxu0 0.0
      %2475 = vmatprep.subr.mxu0 0.0
      %2476 = vmatpush1.msra.mxu0 0.0
      %2477 = vmatprep.subr.mxu0 0.0
      %2478 = vmatpush1.msra.mxu0 0.0
      %2479 = vmatprep.subr.mxu0 0.0
      %2480 = vmatpush1.msra.mxu0 0.0
      %2481 = vmatprep.subr.mxu0 0.0
      %2482 = vmatpush1.msra.mxu0 0.0
      %2483 = vmatprep.subr.mxu0 0.0
      %2484 = vmatpush1.msra.mxu0 0.0
      %2485 = vmatprep.subr.mxu0 0.0
      %2486 = vmatpush1.msra.mxu0 0.0
      %2487 = vmatprep.subr.mxu0 0.0
      %2488 = vmatpush1.msra.mxu0 0.0
      %2489 = vmatprep.subr.mxu0 0.0
      %2490 = vmatpush1.msra.mxu0 0.0
      %2491 = vmatprep.subr.mxu0 0.0
      %2492 = vmatpush1.msra.mxu0 0.0
      %2493 = vmatprep.subr.mxu0 0.0
      %2494 = vmatpush1.msra.mxu0 0.0
      %2495 = vmatprep.subr.mxu0 0.0
      %2496 = vmatpush1.msra.mxu0 0.0
      %2497 = vmatprep.subr.mxu0 0.0
      %2498 = vmatpush1.msra.mxu0 0.0
      %2499 = vmatprep.subr.mxu0 0.0
      %2500 = vmatpush1.msra.mxu0 0.0
      %2501 = vmatprep.subr.mxu0 0.0
      %2502 = vmatpush1.msra.mxu0 0.0
      %2503 = vmatprep.mubr.f32.mxu0 0.0
      %2504 = vmatmul.mubr.f32.gmra.mrb[0].mxu0 %v1872
      %v2505 = vpop.f32.mrb[0].mxu0
      %v2506 = vadd.f32 0.0, %v2505
      %v2507 = vpop.f32.mrb[0].mxu0
      %2508 = vmatprep.mubr.f32.mxu0 0.0
      %2509 = vmatmul.mubr.f32.gmra.mrb[0].mxu0 %v1875
      %v2510 = vpop.f32.mrb[0].mxu0
      %v2511 = vadd.f32 0.0, %v2510
      %v2512 = vpop.f32.mrb[0].mxu0
      %2513 = vmatprep.mubr.f32.mxu0 0.0
      %2514 = vmatmul.mubr.f32.gmra.mrb[0].mxu0 %v1878
      %v2515 = vpop.f32.mrb[0].mxu0
      %v2516 = vadd.f32 0.0, %v2515
      %v2517 = vpop.f32.mrb[0].mxu0
      %2518 = vmatprep.mubr.f32.mxu0 0.0
      %2519 = vmatmul.mubr.f32.gmra.mrb[0].mxu0 %v1881
      %v2520 = vpop.f32.mrb[0].mxu0
      %v2521 = vadd.f32 0.0, %v2520
      %v2522 = vpop.f32.mrb[0].mxu0
      %2523 = vmatprep.mubr.f32.mxu0 0.0
      %2524 = vmatmul.mubr.f32.gmra.mrb[0].mxu0 %v1884
      %v2525 = vpop.f32.mrb[0].mxu0
      %v2526 = vadd.f32 0.0, %v2525
      %v2527 = vpop.f32.mrb[0].mxu0
      %2528 = vmatprep.mubr.f32.mxu0 0.0
      %2529 = vmatmul.mubr.f32.gmra.mrb[0].mxu0 %v1887
      %v2530 = vpop.f32.mrb[0].mxu0
      %v2531 = vadd.f32 0.0, %v2530
      %v2532 = vpop.f32.mrb[0].mxu0
      %2533 = vmatprep.mubr.f32.mxu0 0.0
      %2534 = vmatmul.mubr.f32.gmra.mrb[0].mxu0 %v1890
      %v2535 = vpop.f32.mrb[0].mxu0
      %v2536 = vadd.f32 0.0, %v2535
      %v2537 = vpop.f32.mrb[0].mxu0
      %2538 = vmatprep.mubr.f32.mxu0 0.0
      %2539 = vmatmul.mubr.f32.gmra.mrb[0].mxu0 %v1893
      %v2540 = vpop.f32.mrb[0].mxu0
      %v2541 = vadd.f32 0.0, %v2540
      %v2542 = vpop.f32.mrb[0].mxu0
      %2543 = vmatprep.mubr.f32.mxu0 0.0
      %2544 = vmatmul.mubr.f32.gmra.mrb[0].mxu0 %v1896
      %v2545 = vpop.f32.mrb[0].mxu0
      %v2546 = vadd.f32 0.0, %v2545
      %v2547 = vpop.f32.mrb[0].mxu0
      %2548 = vmatprep.mubr.f32.mxu0 0.0
      %2549 = vmatmul.mubr.f32.gmra.mrb[0].mxu0 %v1899
      %v2550 = vpop.f32.mrb[0].mxu0
      %v2551 = vadd.f32 0.0, %v2550
      %v2552 = vpop.f32.mrb[0].mxu0
      %2553 = vmatprep.mubr.f32.mxu0 0.0
      %2554 = vmatmul.mubr.f32.gmra.mrb[0].mxu0 %v1902
      %v2555 = vpop.f32.mrb[0].mxu0
      %v2556 = vadd.f32 0.0, %v2555
      %v2557 = vpop.f32.mrb[0].mxu0
      %2558 = vmatprep.mubr.f32.mxu0 0.0
      %2559 = vmatmul.mubr.f32.gmra.mrb[0].mxu0 %v1905
      %v2560 = vpop.f32.mrb[0].mxu0
      %v2561 = vadd.f32 0.0, %v2560
      %v2562 = vpop.f32.mrb[0].mxu0
      %2563 = vmatprep.mubr.f32.mxu0 0.0
      %2564 = vmatmul.mubr.f32.gmra.mrb[0].mxu0 %v1908
      %v2565 = vpop.f32.mrb[0].mxu0
      %v2566 = vadd.f32 0.0, %v2565
      %v2567 = vpop.f32.mrb[0].mxu0
      %2568 = vmatprep.mubr.f32.mxu0 0.0
      %2569 = vmatmul.mubr.f32.gmra.mrb[0].mxu0 %v1911
      %v2570 = vpop.f32.mrb[0].mxu0
      %v2571 = vadd.f32 0.0, %v2570
      %v2572 = vpop.f32.mrb[0].mxu0
      %2573 = vmatprep.mubr.f32.mxu0 0.0
      %2574 = vmatmul.mubr.f32.gmra.mrb[0].mxu0 %v2428
      %v2575 = vpop.f32.mrb[0].mxu0
      %v2576 = vadd.f32 0.0, %v2575
      %v2577 = vpop.f32.mrb[0].mxu0
      %2578 = vmatprep.mubr.f32.mxu0 0.0
      %2579 = vmatmul.mubr.f32.gmra.mrb[0].mxu0 %v2431
      %v2580 = vpop.f32.mrb[0].mxu0
      %v2581 = vadd.f32 0.0, %v2580
      %v2582 = vpop.f32.mrb[0].mxu0
      %2583 = vmatprep.mubr.f32.mxu0 0.0
      %2584 = vmatmul.mubr.f32.gmra.mrb[0].mxu0 %v1920
      %v2585 = vpop.f32.mrb[0].mxu0
      %v2586 = vadd.f32 0.0, %v2585
      %v2587 = vpop.f32.mrb[0].mxu0
      %2588 = vmatprep.mubr.f32.mxu0 0.0
      %2589 = vmatmul.mubr.f32.gmra.mrb[0].mxu0 %v1923
      %v2590 = vpop.f32.mrb[0].mxu0
      %v2591 = vadd.f32 0.0, %v2590
      %v2592 = vpop.f32.mrb[0].mxu0
      %2593 = vmatprep.mubr.f32.mxu0 0.0
      %2594 = vmatmul.mubr.f32.gmra.mrb[0].mxu0 %v1926
      %v2595 = vpop.f32.mrb[0].mxu0
      %v2596 = vadd.f32 0.0, %v2595
      %v2597 = vpop.f32.mrb[0].mxu0
      %2598 = vmatprep.mubr.f32.mxu0 0.0
      %2599 = vmatmul.mubr.f32.gmra.mrb[0].mxu0 %v1929
      %v2600 = vpop.f32.mrb[0].mxu0
      %v2601 = vadd.f32 0.0, %v2600
      %v2602 = vpop.f32.mrb[0].mxu0
      %2603 = vmatprep.mubr.f32.mxu0 0.0
      %2604 = vmatmul.mubr.f32.gmra.mrb[0].mxu0 %v1932
      %v2605 = vpop.f32.mrb[0].mxu0
      %v2606 = vadd.f32 0.0, %v2605
      %v2607 = vpop.f32.mrb[0].mxu0
      %2608 = vmatprep.mubr.f32.mxu0 0.0
      %2609 = vmatmul.mubr.f32.gmra.mrb[0].mxu0 %v1935
      %v2610 = vpop.f32.mrb[0].mxu0
      %v2611 = vadd.f32 0.0, %v2610
      %v2612 = vpop.f32.mrb[0].mxu0
      %2613 = vmatprep.mubr.f32.mxu0 0.0
      %2614 = vmatmul.mubr.f32.gmra.mrb[0].mxu0 %v1938
      %v2615 = vpop.f32.mrb[0].mxu0
      %v2616 = vadd.f32 0.0, %v2615
      %v2617 = vpop.f32.mrb[0].mxu0
      %2618 = vmatprep.mubr.f32.mxu0 0.0
      %2619 = vmatmul.mubr.f32.gmra.mrb[0].mxu0 %v1941
      %v2620 = vpop.f32.mrb[0].mxu0
      %v2621 = vadd.f32 0.0, %v2620
      %v2622 = vpop.f32.mrb[0].mxu0
      %2623 = vmatprep.mubr.f32.mxu0 0.0
      %2624 = vmatmul.mubr.f32.gmra.mrb[0].mxu0 %v1944
      %v2625 = vpop.f32.mrb[0].mxu0
      %v2626 = vadd.f32 0.0, %v2625
      %v2627 = vpop.f32.mrb[0].mxu0
      %2628 = vmatprep.mubr.f32.mxu0 0.0
      %2629 = vmatmul.mubr.f32.gmra.mrb[0].mxu0 %v1947
      %v2630 = vpop.f32.mrb[0].mxu0
      %v2631 = vadd.f32 0.0, %v2630
      %v2632 = vpop.f32.mrb[0].mxu0
      %2633 = vmatprep.mubr.f32.mxu0 0.0
      %2634 = vmatmul.mubr.f32.gmra.mrb[0].mxu0 %v1950
      %v2635 = vpop.f32.mrb[0].mxu0
      %v2636 = vadd.f32 0.0, %v2635
      %v2637 = vpop.f32.mrb[0].mxu0
      %2638 = vmatprep.mubr.f32.mxu0 0.0
      %2639 = vmatmul.mubr.f32.gmra.mrb[0].mxu0 %v1953
      %v2640 = vpop.f32.mrb[0].mxu0
      %v2641 = vadd.f32 0.0, %v2640
      %v2642 = vpop.f32.mrb[0].mxu0
      %2643 = vmatprep.mubr.f32.mxu0 0.0
      %2644 = vmatmul.mubr.f32.gmra.mrb[0].mxu0 %v1956
      %v2645 = vpop.f32.mrb[0].mxu0
      %v2646 = vadd.f32 0.0, %v2645
      %v2647 = vpop.f32.mrb[0].mxu0
      %2648 = vmatprep.mubr.f32.mxu0 0.0
      %2649 = vmatmul.mubr.f32.gmra.mrb[0].mxu0 %v1959
      %v2650 = vpop.f32.mrb[0].mxu0
      %v2651 = vadd.f32 0.0, %v2650
      %v2652 = vpop.f32.mrb[0].mxu0
      %2653 = vmatprep.mubr.f32.mxu0 0.0
      %2654 = vmatmul.mubr.f32.gmra.mrb[0].mxu0 %v2434
      %v2655 = vpop.f32.mrb[0].mxu0
      %v2656 = vadd.f32 0.0, %v2655
      %v2657 = vpop.f32.mrb[0].mxu0
      %2658 = vmatprep.mubr.f32.mxu0 0.0
      %2659 = vmatmul.mubr.f32.gmra.mrb[0].mxu0 %v2437
      %v2660 = vpop.f32.mrb[0].mxu0
      %v2661 = vadd.f32 0.0, %v2660
      %v2662 = vpop.f32.mrb[0].mxu0
      %2663 = vdwg.mxu0
      %v2664 = vadd.f32 %v2265, %v2506
      %v2665 = vadd.f32 %v2270, %v2511
      %v2666 = vadd.f32 %v2275, %v2516
      %v2667 = vadd.f32 %v2280, %v2521
      %v2668 = vadd.f32 %v2285, %v2526
      %v2669 = vadd.f32 %v2290, %v2531
      %v2670 = vadd.f32 %v2295, %v2536
      %v2671 = vadd.f32 %v2300, %v2541
      %v2672 = vadd.f32 %v2305, %v2546
      %v2673 = vadd.f32 %v2310, %v2551
      %v2674 = vadd.f32 %v2315, %v2556
      %v2675 = vadd.f32 %v2320, %v2561
      %v2676 = vadd.f32 %v2325, %v2566
      %v2677 = vadd.f32 %v2330, %v2571
      %v2678 = vadd.f32 %v2335, %v2576
      %v2679 = vadd.f32 %v2340, %v2581
      %v2680 = vadd.f32 %v2345, %v2586
      %v2681 = vadd.f32 %v2350, %v2591
      %v2682 = vadd.f32 %v2355, %v2596
      %v2683 = vadd.f32 %v2360, %v2601
      %v2684 = vadd.f32 %v2365, %v2606
      %v2685 = vadd.f32 %v2370, %v2611
      %v2686 = vadd.f32 %v2375, %v2616
      %v2687 = vadd.f32 %v2380, %v2621
      %v2688 = vadd.f32 %v2385, %v2626
      %v2689 = vadd.f32 %v2390, %v2631
      %v2690 = vadd.f32 %v2395, %v2636
      %v2691 = vadd.f32 %v2400, %v2641
      %v2692 = vadd.f32 %v2405, %v2646
      %v2693 = vadd.f32 %v2410, %v2651
      %v2694 = vadd.f32 %v2415, %v2656
      %v2695 = vadd.f32 %v2420, %v2661
      %v2696 = vld [vmem:[%s7] sm:$0x1]
      %v2698 = vlaneseq
      %v2699 = vshrl.u32 %v2698, 7
      %v2700 = vsub.s32 0, %v2699
      %v2701 = vrot.slane %v2696, %v2700
      %v2703 = vadd.f32 %v2664, %v2701
      %v2704 = vadd.f32 %v2665, %v2701
      %v2705 = vadd.f32 %v2666, %v2701
      %v2706 = vadd.f32 %v2667, %v2701
      %v2707 = vadd.f32 %v2668, %v2701
      %v2708 = vadd.f32 %v2669, %v2701
      %v2709 = vadd.f32 %v2670, %v2701
      %v2710 = vadd.f32 %v2671, %v2701
      %v2711 = vadd.f32 %v2672, %v2701
      %v2712 = vadd.f32 %v2673, %v2701
      %v2713 = vadd.f32 %v2674, %v2701
      %v2714 = vadd.f32 %v2675, %v2701
      %v2715 = vadd.f32 %v2676, %v2701
      %v2716 = vadd.f32 %v2677, %v2701
      %v2717 = vadd.f32 %v2678, %v2701
      %v2718 = vadd.f32 %v2679, %v2701
      %v2719 = vadd.f32 %v2680, %v2701
      %v2720 = vadd.f32 %v2681, %v2701
      %v2721 = vadd.f32 %v2682, %v2701
      %v2722 = vadd.f32 %v2683, %v2701
      %v2723 = vadd.f32 %v2684, %v2701
      %v2724 = vadd.f32 %v2685, %v2701
      %v2725 = vadd.f32 %v2686, %v2701
      %v2726 = vadd.f32 %v2687, %v2701
      %v2727 = vadd.f32 %v2688, %v2701
      %v2728 = vadd.f32 %v2689, %v2701
      %v2729 = vadd.f32 %v2690, %v2701
      %v2730 = vadd.f32 %v2691, %v2701
      %v2731 = vadd.f32 %v2692, %v2701
      %v2732 = vadd.f32 %v2693, %v2701
      %v2733 = vadd.f32 %v2694, %v2701
      %v2734 = vadd.f32 %v2695, %v2701
      %v2735 = vmax.f32 %v2703, 0.0
      %v2736 = vmax.f32 %v2704, 0.0
      %v2737 = vmax.f32 %v2705, 0.0
      %v2738 = vmax.f32 %v2706, 0.0
      %v2739 = vmax.f32 %v2707, 0.0
      %v2740 = vmax.f32 %v2708, 0.0
      %v2741 = vmax.f32 %v2709, 0.0
      %v2742 = vmax.f32 %v2710, 0.0
      %v2743 = vmax.f32 %v2711, 0.0
      %v2744 = vmax.f32 %v2712, 0.0
      %v2745 = vmax.f32 %v2713, 0.0
      %v2746 = vmax.f32 %v2714, 0.0
      %v2747 = vmax.f32 %v2715, 0.0
      %v2748 = vmax.f32 %v2716, 0.0
      %v2749 = vmax.f32 %v2717, 0.0
      %v2750 = vmax.f32 %v2718, 0.0
      %v2751 = vmax.f32 %v2719, 0.0
      %v2752 = vmax.f32 %v2720, 0.0
      %v2753 = vmax.f32 %v2721, 0.0
      %v2754 = vmax.f32 %v2722, 0.0
      %v2755 = vmax.f32 %v2723, 0.0
      %v2756 = vmax.f32 %v2724, 0.0
      %v2757 = vmax.f32 %v2725, 0.0
      %v2758 = vmax.f32 %v2726, 0.0
      %v2759 = vmax.f32 %v2727, 0.0
      %v2760 = vmax.f32 %v2728, 0.0
      %v2761 = vmax.f32 %v2729, 0.0
      %v2762 = vmax.f32 %v2730, 0.0
      %v2763 = vmax.f32 %v2731, 0.0
      %v2764 = vmax.f32 %v2732, 0.0
      %v2765 = vmax.f32 %v2733, 0.0
      %v2766 = vmax.f32 %v2734, 0.0
      %2767 = vst.msk [vmem:[%s325] sm:$0xff] %vm1666, %v2735
      %2768 = vst.msk [vmem:[%s325 + $0x8] sm:$0xff] %vm1666, %v2736
      %2769 = vst.msk [vmem:[%s325 + $0x10] sm:$0xff] %vm1666, %v2737
      %2770 = vst.msk [vmem:[%s325 + $0x18] sm:$0xff] %vm1666, %v2738
      %2771 = vst.msk [vmem:[%s325 + $0x20] sm:$0xff] %vm1666, %v2739
      %2772 = vst.msk [vmem:[%s325 + $0x28] sm:$0xff] %vm1666, %v2740
      %2773 = vst.msk [vmem:[%s325 + $0x30] sm:$0xff] %vm1666, %v2741
      %2774 = vst.msk [vmem:[%s325 + $0x38] sm:$0xff] %vm1666, %v2742
      %2775 = vst.msk [vmem:[%s325 + $0x40] sm:$0xff] %vm1666, %v2743
      %2776 = vst.msk [vmem:[%s325 + $0x48] sm:$0xff] %vm1666, %v2744
      %2777 = vst.msk [vmem:[%s325 + $0x50] sm:$0xff] %vm1666, %v2745
      %2778 = vst.msk [vmem:[%s325 + $0x58] sm:$0xff] %vm1666, %v2746
      %2779 = vst.msk [vmem:[%s325 + $0x60] sm:$0xff] %vm1666, %v2747
      %2780 = vst.msk [vmem:[%s325 + $0x68] sm:$0xff] %vm1666, %v2748
      %2781 = vst.msk [vmem:[%s325 + $0x70] sm:$0xff] %vm1666, %v2749
      %2782 = vst.msk [vmem:[%s325 + $0x78] sm:$0xff] %vm1666, %v2750
      %2783 = vst.msk [vmem:[%s325 + $0x80] sm:$0xff] %vm1666, %v2751
      %2784 = vst.msk [vmem:[%s325 + $0x88] sm:$0xff] %vm1666, %v2752
      %2785 = vst.msk [vmem:[%s325 + $0x90] sm:$0xff] %vm1666, %v2753
      %2786 = vst.msk [vmem:[%s325 + $0x98] sm:$0xff] %vm1666, %v2754
      %2787 = vst.msk [vmem:[%s325 + $0xa0] sm:$0xff] %vm1666, %v2755
      %2788 = vst.msk [vmem:[%s325 + $0xa8] sm:$0xff] %vm1666, %v2756
      %2789 = vst.msk [vmem:[%s325 + $0xb0] sm:$0xff] %vm1666, %v2757
      %2790 = vst.msk [vmem:[%s325 + $0xb8] sm:$0xff] %vm1666, %v2758
      %2791 = vst.msk [vmem:[%s325 + $0xc0] sm:$0xff] %vm1666, %v2759
      %2792 = vst.msk [vmem:[%s325 + $0xc8] sm:$0xff] %vm1666, %v2760
      %2793 = vst.msk [vmem:[%s325 + $0xd0] sm:$0xff] %vm1666, %v2761
      %2794 = vst.msk [vmem:[%s325 + $0xd8] sm:$0xff] %vm1666, %v2762
      %2795 = vst.msk [vmem:[%s325 + $0xe0] sm:$0xff] %vm1666, %v2763
      %2796 = vst.msk [vmem:[%s325 + $0xe8] sm:$0xff] %vm1666, %v2764
      %2797 = vst.msk [vmem:[%s325 + $0xf0] sm:$0xff] %vm1666, %v2765
      %2798 = vst.msk [vmem:[%s325 + $0xf8] sm:$0xff] %vm1666, %v2766
      %p2799 = scmp.lt.s32.totalorder %s19, 3
      %s2800 = scalar_select %p2799, %s19, 3
      %s2801 = smul.addr %s2800, 32
      %s2802 = smul.addr %s2801, 8
      %s2803 = scalar_lea.vmem %s8, %s2802
      // Predicated region
      $region53: #{fire_deconv_forward.1} parent=51 // pred_check
        %p2804 = pneg %p215
      $region54: #{fire_deconv_forward.1} parent=51 // pred_check_branch
        %2806 = sbr.rel (%p2804) target = $region56
      $region55: #{fire_deconv_forward.1} parent=51 // pred_region
        _
      $region56: #{fire_deconv_forward.1} parent=51 // pred_fallthru
        _
    $region52: #{fire_deconv_forward.1} parent=5 // pred_fallthru
      _
    %p2807 = scmp.le.s32.totalorder 2, %s14
    // Predicated region
    $region57: #{fire_deconv_forward.1} parent=5 // pred_check
      %p2808 = pneg %p2807
    $region58: #{fire_deconv_forward.1} parent=5 // pred_check_branch
      %2810 = sbr.rel (%p2808) target = $region60
    $region59: #{fire_deconv_forward.1} parent=5 // pred_region
      %s2811 = ssub.s32 %s14, 2
      // Predicated region
      $region61: #{fire_deconv_forward.1} parent=59 // pred_check
        %p2812 = pneg %p221
      $region62: #{fire_deconv_forward.1} parent=59 // pred_check_branch
        %2814 = sbr.rel (%p2812) target = $region64
      $region63: #{fire_deconv_forward.1} parent=59 // pred_region
        %p2815 = scmp.lt.s32.totalorder %s20, 3
        %s2816 = scalar_select %p2815, %s20, 3
        %s2817 = smul.addr %s2816, 32
        %s2818 = smul.addr %s2817, 8
        %s2819 = scalar_lea.vmem %s8, %s2818
      $region64: #{fire_deconv_forward.1} parent=59 // pred_fallthru
        _
    $region60: #{fire_deconv_forward.1} parent=5 // pred_fallthru
      _
  $region6: #{fire_deconv_forward.1} parent=0 // loop_footer
    %s18 = sadd.s32 1, %s14
  $region7: #{fire_deconv_forward.1} parent=0 // loop_footer_branch
    %13 = sbr.rel target = $region3
  $region8: #{fire_deconv_forward.1} parent=0 // loop_exit
    _

</llo_original>
